<compile_context>
chip_gen: v6e
topology: v6e:2x2x1
jax: 0.10.0
libtpu: 0.0.40
codegen_flags: <defaults>
</compile_context>

<pallas_src>
import math

import jax
import jax.numpy as jnp
from jax.experimental import pallas as pl
from jax.experimental.pallas import tpu as pltpu


# ----------------------------------------------------------------------------
# Kernel
# ----------------------------------------------------------------------------
def make_qnet_kernel(blocks, layout, action_size, v_lane):
    """blocks: tuple of (in_features, out_features, has_downsample) per residual block.
    layout: tuple of (row_offset, k_rows, lane_width) per matmul, into the weight slab."""

    def kernel(state_ref, w_ref, bias_ref, out_ref):
        lidx = 0

        def next_wb():
            nonlocal lidx
            off, k, n = layout[lidx]                 # static python ints
            w = w_ref[off:off + k, :n]               # bf16 (k, n), static slice of slab
            b = bias_ref[lidx:lidx + 1, :n]          # f32  (1, n)
            lidx += 1
            return w, b

        def mxu(x, w):
            # bf16 operands, f32 accumulation on the MXU.
            return jnp.dot(x.astype(jnp.bfloat16), w,
                           preferred_element_type=jnp.float32)

        x = state_ref[...]                           # (B, state_size) f32

        # --- residual trunk (layer1 / layer2 / layer3, flattened in order) ---
        for (_, out_f, has_ds) in blocks:
            w1, b1 = next_wb()
            if has_ds:
                # [w1 at lanes 0:out_f | wd at lanes 128:128+out_f] in one matmul;
                # both halves are aligned to a 128-lane vreg boundary.
                h_cat = mxu(x, w1) + b1              # (B, 256)
                h = h_cat[:, :out_f]
                residual = h_cat[:, 128:128 + out_f]
            else:
                h = mxu(x, w1) + b1
                residual = x
            h = jnp.maximum(h, 0.0)
            w2, b2 = next_wb()
            h = mxu(h, w2) + b2
            x = jnp.maximum(h + residual, 0.0)

        # --- dueling heads (concatenated) ---
        w, b = next_wb()
        h = jnp.maximum(mxu(x, w) + b, 0.0)          # (B, 64) = [value_fc | advantage_fc]
        w, b = next_wb()
        head2 = mxu(h, w) + b                        # (B, out_pad)
        a = head2[:, :action_size]                   # lane-0-aligned advantage
        v = head2[:, v_lane:v_lane + 1]              # value at its own lane
        mean_a = jnp.mean(a)   # global scalar mean, matches PyTorch advantage.mean()

        # Lane-dense padded write; q-values live in columns 0..action_size-1.
        out_ref[...] = head2 + v - mean_a

    return kernel


def qnetwork_forward(state, weight_pack, bias_pack, blocks, layout,
                     action_size, out_pad, v_lane):
    B = state.shape[0]
    vmem = pl.BlockSpec(memory_space=pltpu.MemorySpace.VMEM)
    flops = 2 * B * sum(k * n for (_, k, n) in layout)
    bytes_accessed = (state.size * state.dtype.itemsize
                      + weight_pack.size * weight_pack.dtype.itemsize
                      + bias_pack.size * bias_pack.dtype.itemsize
                      + B * out_pad * 4)
    padded = pl.pallas_call(
        make_qnet_kernel(blocks, layout, action_size, v_lane),
        out_shape=jax.ShapeDtypeStruct((B, out_pad), jnp.float32),
        in_specs=[vmem, vmem, vmem],
        out_specs=vmem,
        cost_estimate=pl.CostEstimate(flops=int(flops), transcendentals=0,
                                      bytes_accessed=int(bytes_accessed)),
        compiler_params=pltpu.CompilerParams(vmem_limit_bytes=16 * 1024 * 1024),
    )(state, weight_pack, bias_pack)
    return padded[:, :action_size]                   # lane-0-aligned -> free view


# ----------------------------------------------------------------------------
# Deterministic parameter construction (PyTorch-style init shapes)
# ----------------------------------------------------------------------------
def init_linear(key, fan_in, fan_out):
    k1, k2 = jax.random.split(key)
    bound = 1.0 / math.sqrt(fan_in)
    w = jax.random.uniform(k1, (fan_in, fan_out), jnp.float32, -bound, bound)
    b = jax.random.uniform(k2, (1, fan_out), jnp.float32, -bound, bound)
    return w, b


def init_bn(key, feat):
    k1, k2, k3, k4 = jax.random.split(key, 4)
    return dict(
        gamma=1.0 + 0.1 * jax.random.normal(k1, (1, feat), jnp.float32),
        beta=0.1 * jax.random.normal(k2, (1, feat), jnp.float32),
        mean=0.1 * jax.random.normal(k3, (1, feat), jnp.float32),
        var=jnp.abs(1.0 + 0.1 * jax.random.normal(k4, (1, feat), jnp.float32)),
    )


def build_raw_params(key, state_size, action_size, block_nums):
    raw_blocks = []
    blocks = []
    in_units = state_size
    for outputs, bnum in zip((128, 64, 32), block_nums):
        for i in range(bnum):
            cur_in = in_units if i == 0 else outputs
            has_ds = (i == 0) and (cur_in != outputs)
            key, k1, k2, k3, k4, k5, k6 = jax.random.split(key, 7)
            blk = dict(
                w1=init_linear(k1, cur_in, outputs), bn1=init_bn(k2, outputs),
                w2=init_linear(k3, outputs, outputs), bn2=init_bn(k4, outputs),
            )
            if has_ds:
                blk["wd"] = init_linear(k5, cur_in, outputs)
                blk["bnd"] = init_bn(k6, outputs)
            raw_blocks.append(blk)
            blocks.append((cur_in, outputs, has_ds))
        in_units = outputs
    key, kv1, kv2, ka1, ka2 = jax.random.split(key, 5)
    heads = dict(
        value_fc=init_linear(kv1, 32, 32),
        value=init_linear(kv2, 32, 1),
        advantage_fc=init_linear(ka1, 32, 32),
        advantage=init_linear(ka2, 32, action_size),
    )
    return dict(blocks=raw_blocks, heads=heads), tuple(blocks)


# ----------------------------------------------------------------------------
# Build-time fusion: fold BN, concatenate matmuls, pack EVERYTHING into 2 slabs
# ----------------------------------------------------------------------------
def _fold_bn(w, b, bn, eps=1e-5):
    scale = bn["gamma"] / jnp.sqrt(bn["var"] + eps)
    shift = bn["beta"] - bn["mean"] * scale
    return w * scale, b * scale + shift


def prepare_fused_params(raw, blocks, action_size):
    out_pad = max(128, -(-(action_size + 8) // 128) * 128)
    v_lane = out_pad - 8                 # value lane, distinct from advantage lanes [0, A)
    lanes = max(256, out_pad)

    layers = []                          # (k_rows, active_width, w_f32 (k, lanes), b_f32 (lanes,))

    def add(w, b, width):
        k = w.shape[0]
        wp = jnp.zeros((k, lanes), jnp.float32).at[:, :w.shape[1]].set(w)
        bp = jnp.zeros((lanes,), jnp.float32).at[:b.shape[1]].set(b[0])
        layers.append((k, width, wp, bp))

    for blk, (cin, cout, has_ds) in zip(raw["blocks"], blocks):
        w1, b1 = _fold_bn(*blk["w1"], blk["bn1"])
        w2, b2 = _fold_bn(*blk["w2"], blk["bn2"])
        if has_ds:
            wd, bd = _fold_bn(*blk["wd"], blk["bnd"])
            # Fused [w1 | wd] with the downsample half starting at lane 128 (vreg boundary).
            wf = (jnp.zeros((cin, lanes), jnp.float32)
                  .at[:, :cout].set(w1)
                  .at[:, 128:128 + cout].set(wd))
            bf = (jnp.zeros((lanes,), jnp.float32)
                  .at[:cout].set(b1[0])
                  .at[128:128 + cout].set(bd[0]))
            layers.append((cin, 256, wf, bf))
        else:
            add(w1, b1, cout)
        add(w2, b2, cout)

    wv1, bv1 = raw["heads"]["value_fc"]
    wv2, bv2 = raw["heads"]["value"]
    wa1, ba1 = raw["heads"]["advantage_fc"]
    wa2, ba2 = raw["heads"]["advantage"]
    # [value_fc | advantage_fc] -> one (32, 64) matmul.
    add(jnp.concatenate([wv1, wa1], axis=1), jnp.concatenate([bv1, ba1], axis=1), 64)
    # head2: advantage at lanes [0, A) (lane-0-aligned Q slice), value at lane v_lane.
    wh2 = (jnp.zeros((64, lanes), jnp.float32)
           .at[32:64, :action_size].set(wa2)
           .at[:32, v_lane:v_lane + 1].set(wv2))
    bh2 = (jnp.zeros((lanes,), jnp.float32)
           .at[:action_size].set(ba2[0])
           .at[v_lane].set(bv2[0, 0]))
    layers.append((64, out_pad, wh2, bh2))

    # Pack all weights into ONE bf16 slab (row offsets 16-aligned for bf16 sublane
    # packing) and all biases into ONE f32 (n_layers, lanes) array -> 3 input DMAs.
    layout = []
    off = 0
    for (k, width, _, _) in layers:
        layout.append((off, k, width))
        off += -(-k // 16) * 16
    weight_pack = jnp.zeros((off, lanes), jnp.float32)
    for (o, k, _), (_, _, wp, _) in zip(layout, layers):
        weight_pack = weight_pack.at[o:o + k, :].set(wp)
    weight_pack = weight_pack.astype(jnp.bfloat16)           # bf16 MXU operands
    bias_pack = jnp.stack([bp for (_, _, _, bp) in layers], axis=0)  # f32, one DMA
    return weight_pack, bias_pack, tuple(layout), out_pad, v_lane


# ----------------------------------------------------------------------------
# References
# ----------------------------------------------------------------------------
def qnetwork_ref_raw(state, raw, blocks, eps=1e-5):
    """Unfused f32 reference: Linear -> BN(eval) -> ReLU -> Linear -> BN + residual -> ReLU."""
    def bn(x, p):
        return (x - p["mean"]) / jnp.sqrt(p["var"] + eps) * p["gamma"] + p["beta"]

    x = state
    for blk, (_, _, has_ds) in zip(raw["blocks"], blocks):
        w1, b1 = blk["w1"]
        w2, b2 = blk["w2"]
        residual = x
        if has_ds:
            wd, bd = blk["wd"]
            residual = bn(x @ wd + bd, blk["bnd"])
        h = jnp.maximum(bn(x @ w1 + b1, blk["bn1"]), 0.0)
        h = bn(h @ w2 + b2, blk["bn2"])
        x = jnp.maximum(h + residual, 0.0)
    wv1, bv1 = raw["heads"]["value_fc"]
    wv2, bv2 = raw["heads"]["value"]
    wa1, ba1 = raw["heads"]["advantage_fc"]
    wa2, ba2 = raw["heads"]["advantage"]
    v = jnp.maximum(x @ wv1 + bv1, 0.0) @ wv2 + bv2
    a = jnp.maximum(x @ wa1 + ba1, 0.0) @ wa2 + ba2
    return v + a - jnp.mean(a)


def qnetwork_ref_fused(state, weight_pack, bias_pack, blocks, layout, action_size, v_lane):
    """Plain-JAX replay of the exact fused (bf16-matmul) math the kernel runs."""
    lidx = 0

    def next_wb():
        nonlocal lidx
        off, k, n = layout[lidx]
        w = weight_pack[off:off + k, :n]
        b = bias_pack[lidx:lidx + 1, :n]
        lidx += 1
        return w, b

    def mxu(x, w):
        return jnp.dot(x.astype(jnp.bfloat16), w, preferred_element_type=jnp.float32)

    x = state
    for (_, cout, has_ds) in blocks:
        w1, b1 = next_wb()
        if has_ds:
            h_cat = mxu(x, w1) + b1
            h, residual = h_cat[:, :cout], h_cat[:, 128:128 + cout]
        else:
            h = mxu(x, w1) + b1
            residual = x
        h = jnp.maximum(h, 0.0)
        w2, b2 = next_wb()
        h = mxu(h, w2) + b2
        x = jnp.maximum(h + residual, 0.0)
    w, b = next_wb()
    h = jnp.maximum(mxu(x, w) + b, 0.0)
    w, b = next_wb()
    head2 = mxu(h, w) + b
    a = head2[:, :action_size]
    v = head2[:, v_lane:v_lane + 1]
    return v + a - jnp.mean(a)


# ----------------------------------------------------------------------------
if __name__ == "__main__":
    state_size = 64
    action_size = 8
    batch = 128                 # review: batch many rows per call (fills MXU M, amortizes launch)
    block_nums = (1, 2, 1)      # exercises both the downsample and plain residual paths

    key = jax.random.PRNGKey(0)
    key_params, key_state = jax.random.split(key)
    raw, blocks = build_raw_params(key_params, state_size, action_size, block_nums)
    weight_pack, bias_pack, layout, out_pad, v_lane = prepare_fused_params(
        raw, blocks, action_size)
    state = jax.random.normal(key_state, (batch, state_size), jnp.float32)

    q = qnetwork_forward(state, weight_pack, bias_pack, blocks, layout,
                         action_size, out_pad, v_lane)
    q = jax.block_until_ready(q)
    assert q.shape == (batch, action_size)

    # Strict check: kernel vs. plain-JAX replay of the same fused bf16 math.
    ref_fused = qnetwork_ref_fused(state, weight_pack, bias_pack, blocks, layout,
                                   action_size, v_lane)
    assert jnp.allclose(q, ref_fused, rtol=2e-3, atol=2e-3), "mismatch vs fused reference"

    # Loose check vs. the unfused f32 eval-mode reference (bf16 matmul operands are
    # the only approximation introduced; error compounds over ~10 matmuls).
    err = float(jnp.max(jnp.abs(q - qnetwork_ref_raw(state, raw, blocks))))
    assert err < 1e-1, f"mismatch vs f32 reference (max abs err {err})"

    print("KERNEL_OK")
</pallas_src>

<mosaic_0001>
module attributes {stable_mosaic.version = 11 : i64} {
  func.func @kernel(%arg0: memref<128x64xf32, #tpu.memory_space<vmem>>, %arg1: memref<704x256xbf16, #tpu.memory_space<vmem>>, %arg2: memref<10x256xf32, #tpu.memory_space<vmem>>, %arg3: memref<128x128xf32, #tpu.memory_space<vmem>>) attributes {dimension_semantics = [], scalar_prefetch = 0 : i64, scratch_operands = 0 : i64, tpu.core_type = #tpu.core_type<tc>} {
    %c0 = arith.constant 0 : index
    %c0_0 = arith.constant 0 : index
    %0 = vector.load %arg0[%c0, %c0_0] : memref<128x64xf32, #tpu.memory_space<vmem>>, vector<128x64xf32>
    %c0_1 = arith.constant 0 : index
    %c0_2 = arith.constant 0 : index
    %1 = vector.load %arg1[%c0_1, %c0_2] : memref<704x256xbf16, #tpu.memory_space<vmem>>, vector<64x256xbf16>
    %c0_3 = arith.constant 0 : index
    %c0_4 = arith.constant 0 : index
    %2 = vector.load %arg2[%c0_3, %c0_4] : memref<10x256xf32, #tpu.memory_space<vmem>>, vector<1x256xf32>
    %3 = arith.truncf %0 : vector<128x64xf32> to vector<128x64xbf16>
    %cst = arith.constant dense<0.000000e+00> : vector<128x256xf32>
    %4 = tpu.matmul %3, %1, %cst {dimension_numbers = #tpu.dot_dimension_numbers<[1], [0], [0], [1], [0, 0, 1, 1], [], []>} : vector<128x64xbf16>, vector<64x256xbf16>, vector<128x256xf32> -> vector<128x256xf32>
    %5 = vector.broadcast %2 : vector<1x256xf32> to vector<128x256xf32>
    %6 = arith.addf %4, %5 : vector<128x256xf32>
    %7 = vector.extract_strided_slice %6 {offsets = [0, 0], sizes = [128, 128], strides = [1, 1]} : vector<128x256xf32> to vector<128x128xf32>
    %8 = vector.extract_strided_slice %6 {offsets = [0, 128], sizes = [128, 128], strides = [1, 1]} : vector<128x256xf32> to vector<128x128xf32>
    %cst_5 = arith.constant 0.000000e+00 : f32
    %9 = vector.broadcast %cst_5 : f32 to vector<128x128xf32>
    %10 = arith.maximumf %7, %9 : vector<128x128xf32>
    %c64 = arith.constant 64 : index
    %c0_6 = arith.constant 0 : index
    %11 = vector.load %arg1[%c64, %c0_6] : memref<704x256xbf16, #tpu.memory_space<vmem>>, vector<128x128xbf16>
    %c1 = arith.constant 1 : index
    %c0_7 = arith.constant 0 : index
    %12 = vector.load %arg2[%c1, %c0_7] : memref<10x256xf32, #tpu.memory_space<vmem>>, vector<1x128xf32>
    %13 = arith.truncf %10 : vector<128x128xf32> to vector<128x128xbf16>
    %cst_8 = arith.constant dense<0.000000e+00> : vector<128x128xf32>
    %14 = tpu.matmul %13, %11, %cst_8 {dimension_numbers = #tpu.dot_dimension_numbers<[1], [0], [0], [1], [0, 0, 1, 1], [], []>} : vector<128x128xbf16>, vector<128x128xbf16>, vector<128x128xf32> -> vector<128x128xf32>
    %15 = vector.broadcast %12 : vector<1x128xf32> to vector<128x128xf32>
    %16 = arith.addf %14, %15 : vector<128x128xf32>
    %17 = arith.addf %16, %8 : vector<128x128xf32>
    %cst_9 = arith.constant 0.000000e+00 : f32
    %18 = vector.broadcast %cst_9 : f32 to vector<128x128xf32>
    %19 = arith.maximumf %17, %18 : vector<128x128xf32>
    %c192 = arith.constant 192 : index
    %c0_10 = arith.constant 0 : index
    %20 = vector.load %arg1[%c192, %c0_10] : memref<704x256xbf16, #tpu.memory_space<vmem>>, vector<128x256xbf16>
    %c2 = arith.constant 2 : index
    %c0_11 = arith.constant 0 : index
    %21 = vector.load %arg2[%c2, %c0_11] : memref<10x256xf32, #tpu.memory_space<vmem>>, vector<1x256xf32>
    %22 = arith.truncf %19 : vector<128x128xf32> to vector<128x128xbf16>
    %cst_12 = arith.constant dense<0.000000e+00> : vector<128x256xf32>
    %23 = tpu.matmul %22, %20, %cst_12 {dimension_numbers = #tpu.dot_dimension_numbers<[1], [0], [0], [1], [0, 0, 1, 1], [], []>} : vector<128x128xbf16>, vector<128x256xbf16>, vector<128x256xf32> -> vector<128x256xf32>
    %24 = vector.broadcast %21 : vector<1x256xf32> to vector<128x256xf32>
    %25 = arith.addf %23, %24 : vector<128x256xf32>
    %26 = vector.extract_strided_slice %25 {offsets = [0, 0], sizes = [128, 64], strides = [1, 1]} : vector<128x256xf32> to vector<128x64xf32>
    %27 = vector.extract_strided_slice %25 {offsets = [0, 128], sizes = [128, 64], strides = [1, 1]} : vector<128x256xf32> to vector<128x64xf32>
    %cst_13 = arith.constant 0.000000e+00 : f32
    %28 = vector.broadcast %cst_13 : f32 to vector<128x64xf32>
    %29 = arith.maximumf %26, %28 : vector<128x64xf32>
    %c320 = arith.constant 320 : index
    %c0_14 = arith.constant 0 : index
    %30 = vector.load %arg1[%c320, %c0_14] : memref<704x256xbf16, #tpu.memory_space<vmem>>, vector<64x64xbf16>
    %c3 = arith.constant 3 : index
    %c0_15 = arith.constant 0 : index
    %31 = vector.load %arg2[%c3, %c0_15] : memref<10x256xf32, #tpu.memory_space<vmem>>, vector<1x64xf32>
    %32 = arith.truncf %29 : vector<128x64xf32> to vector<128x64xbf16>
    %cst_16 = arith.constant dense<0.000000e+00> : vector<128x64xf32>
    %33 = tpu.matmul %32, %30, %cst_16 {dimension_numbers = #tpu.dot_dimension_numbers<[1], [0], [0], [1], [0, 0, 1, 1], [], []>} : vector<128x64xbf16>, vector<64x64xbf16>, vector<128x64xf32> -> vector<128x64xf32>
    %34 = vector.broadcast %31 : vector<1x64xf32> to vector<128x64xf32>
    %35 = arith.addf %33, %34 : vector<128x64xf32>
    %36 = arith.addf %35, %27 : vector<128x64xf32>
    %cst_17 = arith.constant 0.000000e+00 : f32
    %37 = vector.broadcast %cst_17 : f32 to vector<128x64xf32>
    %38 = arith.maximumf %36, %37 : vector<128x64xf32>
    %c384 = arith.constant 384 : index
    %c0_18 = arith.constant 0 : index
    %39 = vector.load %arg1[%c384, %c0_18] : memref<704x256xbf16, #tpu.memory_space<vmem>>, vector<64x64xbf16>
    %c4 = arith.constant 4 : index
    %c0_19 = arith.constant 0 : index
    %40 = vector.load %arg2[%c4, %c0_19] : memref<10x256xf32, #tpu.memory_space<vmem>>, vector<1x64xf32>
    %41 = arith.truncf %38 : vector<128x64xf32> to vector<128x64xbf16>
    %cst_20 = arith.constant dense<0.000000e+00> : vector<128x64xf32>
    %42 = tpu.matmul %41, %39, %cst_20 {dimension_numbers = #tpu.dot_dimension_numbers<[1], [0], [0], [1], [0, 0, 1, 1], [], []>} : vector<128x64xbf16>, vector<64x64xbf16>, vector<128x64xf32> -> vector<128x64xf32>
    %43 = vector.broadcast %40 : vector<1x64xf32> to vector<128x64xf32>
    %44 = arith.addf %42, %43 : vector<128x64xf32>
    %cst_21 = arith.constant 0.000000e+00 : f32
    %45 = vector.broadcast %cst_21 : f32 to vector<128x64xf32>
    %46 = arith.maximumf %44, %45 : vector<128x64xf32>
    %c448 = arith.constant 448 : index
    %c0_22 = arith.constant 0 : index
    %47 = vector.load %arg1[%c448, %c0_22] : memref<704x256xbf16, #tpu.memory_space<vmem>>, vector<64x64xbf16>
    %c5 = arith.constant 5 : index
    %c0_23 = arith.constant 0 : index
    %48 = vector.load %arg2[%c5, %c0_23] : memref<10x256xf32, #tpu.memory_space<vmem>>, vector<1x64xf32>
    %49 = arith.truncf %46 : vector<128x64xf32> to vector<128x64xbf16>
    %cst_24 = arith.constant dense<0.000000e+00> : vector<128x64xf32>
    %50 = tpu.matmul %49, %47, %cst_24 {dimension_numbers = #tpu.dot_dimension_numbers<[1], [0], [0], [1], [0, 0, 1, 1], [], []>} : vector<128x64xbf16>, vector<64x64xbf16>, vector<128x64xf32> -> vector<128x64xf32>
    %51 = vector.broadcast %48 : vector<1x64xf32> to vector<128x64xf32>
    %52 = arith.addf %50, %51 : vector<128x64xf32>
    %53 = arith.addf %52, %38 : vector<128x64xf32>
    %cst_25 = arith.constant 0.000000e+00 : f32
    %54 = vector.broadcast %cst_25 : f32 to vector<128x64xf32>
    %55 = arith.maximumf %53, %54 : vector<128x64xf32>
    %c512 = arith.constant 512 : index
    %c0_26 = arith.constant 0 : index
    %56 = vector.load %arg1[%c512, %c0_26] : memref<704x256xbf16, #tpu.memory_space<vmem>>, vector<64x256xbf16>
    %c6 = arith.constant 6 : index
    %c0_27 = arith.constant 0 : index
    %57 = vector.load %arg2[%c6, %c0_27] : memref<10x256xf32, #tpu.memory_space<vmem>>, vector<1x256xf32>
    %58 = arith.truncf %55 : vector<128x64xf32> to vector<128x64xbf16>
    %cst_28 = arith.constant dense<0.000000e+00> : vector<128x256xf32>
    %59 = tpu.matmul %58, %56, %cst_28 {dimension_numbers = #tpu.dot_dimension_numbers<[1], [0], [0], [1], [0, 0, 1, 1], [], []>} : vector<128x64xbf16>, vector<64x256xbf16>, vector<128x256xf32> -> vector<128x256xf32>
    %60 = vector.broadcast %57 : vector<1x256xf32> to vector<128x256xf32>
    %61 = arith.addf %59, %60 : vector<128x256xf32>
    %62 = vector.extract_strided_slice %61 {offsets = [0, 0], sizes = [128, 32], strides = [1, 1]} : vector<128x256xf32> to vector<128x32xf32>
    %63 = vector.extract_strided_slice %61 {offsets = [0, 128], sizes = [128, 32], strides = [1, 1]} : vector<128x256xf32> to vector<128x32xf32>
    %cst_29 = arith.constant 0.000000e+00 : f32
    %64 = vector.broadcast %cst_29 : f32 to vector<128x32xf32>
    %65 = arith.maximumf %62, %64 : vector<128x32xf32>
    %c576 = arith.constant 576 : index
    %c0_30 = arith.constant 0 : index
    %66 = vector.load %arg1[%c576, %c0_30] : memref<704x256xbf16, #tpu.memory_space<vmem>>, vector<32x32xbf16>
    %c7 = arith.constant 7 : index
    %c0_31 = arith.constant 0 : index
    %67 = vector.load %arg2[%c7, %c0_31] : memref<10x256xf32, #tpu.memory_space<vmem>>, vector<1x32xf32>
    %68 = arith.truncf %65 : vector<128x32xf32> to vector<128x32xbf16>
    %cst_32 = arith.constant dense<0.000000e+00> : vector<128x32xf32>
    %69 = tpu.matmul %68, %66, %cst_32 {dimension_numbers = #tpu.dot_dimension_numbers<[1], [0], [0], [1], [0, 0, 1, 1], [], []>} : vector<128x32xbf16>, vector<32x32xbf16>, vector<128x32xf32> -> vector<128x32xf32>
    %70 = vector.broadcast %67 : vector<1x32xf32> to vector<128x32xf32>
    %71 = arith.addf %69, %70 : vector<128x32xf32>
    %72 = arith.addf %71, %63 : vector<128x32xf32>
    %cst_33 = arith.constant 0.000000e+00 : f32
    %73 = vector.broadcast %cst_33 : f32 to vector<128x32xf32>
    %74 = arith.maximumf %72, %73 : vector<128x32xf32>
    %c608 = arith.constant 608 : index
    %c0_34 = arith.constant 0 : index
    %75 = vector.load %arg1[%c608, %c0_34] : memref<704x256xbf16, #tpu.memory_space<vmem>>, vector<32x64xbf16>
    %c8 = arith.constant 8 : index
    %c0_35 = arith.constant 0 : index
    %76 = vector.load %arg2[%c8, %c0_35] : memref<10x256xf32, #tpu.memory_space<vmem>>, vector<1x64xf32>
    %77 = arith.truncf %74 : vector<128x32xf32> to vector<128x32xbf16>
    %cst_36 = arith.constant dense<0.000000e+00> : vector<128x64xf32>
    %78 = tpu.matmul %77, %75, %cst_36 {dimension_numbers = #tpu.dot_dimension_numbers<[1], [0], [0], [1], [0, 0, 1, 1], [], []>} : vector<128x32xbf16>, vector<32x64xbf16>, vector<128x64xf32> -> vector<128x64xf32>
    %79 = vector.broadcast %76 : vector<1x64xf32> to vector<128x64xf32>
    %80 = arith.addf %78, %79 : vector<128x64xf32>
    %cst_37 = arith.constant 0.000000e+00 : f32
    %81 = vector.broadcast %cst_37 : f32 to vector<128x64xf32>
    %82 = arith.maximumf %80, %81 : vector<128x64xf32>
    %c640 = arith.constant 640 : index
    %c0_38 = arith.constant 0 : index
    %83 = vector.load %arg1[%c640, %c0_38] : memref<704x256xbf16, #tpu.memory_space<vmem>>, vector<64x128xbf16>
    %c9 = arith.constant 9 : index
    %c0_39 = arith.constant 0 : index
    %84 = vector.load %arg2[%c9, %c0_39] : memref<10x256xf32, #tpu.memory_space<vmem>>, vector<1x128xf32>
    %85 = arith.truncf %82 : vector<128x64xf32> to vector<128x64xbf16>
    %cst_40 = arith.constant dense<0.000000e+00> : vector<128x128xf32>
    %86 = tpu.matmul %85, %83, %cst_40 {dimension_numbers = #tpu.dot_dimension_numbers<[1], [0], [0], [1], [0, 0, 1, 1], [], []>} : vector<128x64xbf16>, vector<64x128xbf16>, vector<128x128xf32> -> vector<128x128xf32>
    %87 = vector.broadcast %84 : vector<1x128xf32> to vector<128x128xf32>
    %88 = arith.addf %86, %87 : vector<128x128xf32>
    %89 = vector.extract_strided_slice %88 {offsets = [0, 0], sizes = [128, 8], strides = [1, 1]} : vector<128x128xf32> to vector<128x8xf32>
    %90 = vector.extract_strided_slice %88 {offsets = [0, 120], sizes = [128, 1], strides = [1, 1]} : vector<128x128xf32> to vector<128x1xf32>
    %91 = vector.shape_cast %89 : vector<128x8xf32> to vector<1x128x8xf32>
    %cst_41 = arith.constant dense<0.000000e+00> : vector<1xf32>
    %92 = vector.multi_reduction <add>, %91, %cst_41 [1, 2] : vector<1x128x8xf32> to vector<1xf32>
    %93 = vector.shape_cast %92 : vector<1xf32> to vector<1x1x1xf32>
    %94 = vector.extract %93[0, 0, 0] : f32 from vector<1x1x1xf32>
    %cst_42 = arith.constant 1.024000e+03 : f32
    %95 = arith.divf %94, %cst_42 : f32
    %96 = vector.broadcast %90 : vector<128x1xf32> to vector<128x128xf32>
    %97 = arith.addf %88, %96 : vector<128x128xf32>
    %98 = vector.broadcast %95 : f32 to vector<128x128xf32>
    %99 = arith.subf %97, %98 : vector<128x128xf32>
    %c0_43 = arith.constant 0 : index
    %c0_44 = arith.constant 0 : index
    %100 = vector.load %arg3[%c0_43, %c0_44] : memref<128x128xf32, #tpu.memory_space<vmem>>, vector<128x128xf32>
    tpu.vector_store %arg3[%c0_43, %c0_44], %99 {strides = array<i32>} : memref<128x128xf32, #tpu.memory_space<vmem>>, vector<128x128xf32>,
    return
  }
}

</mosaic_0001>

<llo_original>
// kernel: tpu_custom_call.1
$region0: #{tpu_custom_call.1}
  #allocation0 [shape = 'u32[]', space=smem, size = 0x4, offset = 0x4, fixed_abs, tag = 'smem constant byte address 0x4 - core index']
  #allocation1 [shape = 'u32[144,128]{1,0:T(1,128)}', space=vmem, size = 0x12000, scoped, tag = 'internal scratch']
  %s0 = inlined_call_operand.vmem [shape: f32[128,64], index: 0, kind: input, shape index: {}]
  %s1 = inlined_call_operand.hbm [shape: bf16[704,256], index: 1, kind: input, shape index: {}]
  %s2 = inlined_call_operand.vmem [shape: f32[10,256], index: 2, kind: input, shape index: {}]
  %s3 = inlined_call_operand.hbm [shape: f32[128,128], index: 3, kind: output, shape index: {}]
  %s4 = sld [smem:[#allocation0]]
  $region26: #{tpu_custom_call.1} parent=0
    _
  %s6 = ssub.s32 1, %s4
  %s7 = scalar_select 0, %s6, %s4
  $region1: #{tpu_custom_call.1} parent=0
    #allocation2 [shape = 'u8[360448]{0}', space=vmem, size = 0x58000, scoped, tag = 'input window, operand 1, single buffered']
    #allocation3 [shape = 's32[1]{0}', space=sflag, size = 0x4, scoped, tag = 'scoped memory for tpu_custom_call.1']
    #allocation4 [shape = 's32[1]{0}', space=sflag, size = 0x4, scoped, tag = 'scoped memory for tpu_custom_call.1']
    #allocation5 [shape = 'u8[65536]{0}', space=vmem, size = 0x10000, scoped, tag = 'output window, operand 0, single buffered']
    %8 = vsyncpa [#allocation3], 0
    %9 = vsyncpa [#allocation4], 0
    // Predicated region
    $region2: #{tpu_custom_call.1} parent=1 // pred_check
      _
    $region3: #{tpu_custom_call.1} parent=1 // pred_check_branch
      %11 = sbr.rel (0) target = $region5
    $region4: #{tpu_custom_call.1} parent=1 // pred_region
      _
    $region5: #{tpu_custom_call.1} parent=1 // pred_fallthru
      _
    // Predicated region
    $region6: #{tpu_custom_call.1} parent=1 // pred_check
      _
    $region7: #{tpu_custom_call.1} parent=1 // pred_check_branch
      %13 = sbr.rel (0) target = $region9
    $region8: #{tpu_custom_call.1} parent=1 // pred_region
      %s15 = ssub.s32 11264, 11264
      %16 = vsyncadd [#allocation3], %s15
      %s17 = sshll.u32 [#allocation2], 4
      %s18 = int_to_ptr.vmem [resolvable:$true] %s17
      %23 = dma.hbm_to_vmem [thread:$0]  %s1, 11264, %s18, [#allocation3], 128, 128, 8
    $region9: #{tpu_custom_call.1} parent=1 // pred_fallthru
      _
    // Predicated region
    $region10: #{tpu_custom_call.1} parent=1 // pred_check
      _
    $region11: #{tpu_custom_call.1} parent=1 // pred_check_branch
      %25 = sbr.rel (0) target = $region13
    $region12: #{tpu_custom_call.1} parent=1 // pred_region
      _
    $region13: #{tpu_custom_call.1} parent=1 // pred_fallthru
      _
    // Predicated region
    $region14: #{tpu_custom_call.1} parent=1 // pred_check
      _
    $region15: #{tpu_custom_call.1} parent=1 // pred_check_branch
      %27 = sbr.rel (0) target = $region17
    $region16: #{tpu_custom_call.1} parent=1 // pred_region
      %28 = dma.done [#allocation3], 11264
    $region17: #{tpu_custom_call.1} parent=1 // pred_fallthru
      _
    %v30 = vld [vmem:[%s0] sm:$0xff]
    %v31 = vld [vmem:[%s0 + $0x8] sm:$0xff]
    %v32 = vld [vmem:[%s0 + $0x10] sm:$0xff]
    %v33 = vld [vmem:[%s0 + $0x18] sm:$0xff]
    %v34 = vld [vmem:[%s0 + $0x20] sm:$0xff]
    %v35 = vld [vmem:[%s0 + $0x28] sm:$0xff]
    %v36 = vld [vmem:[%s0 + $0x30] sm:$0xff]
    %v37 = vld [vmem:[%s0 + $0x38] sm:$0xff]
    %v38 = vld [vmem:[%s0 + $0x40] sm:$0xff]
    %v39 = vld [vmem:[%s0 + $0x48] sm:$0xff]
    %v40 = vld [vmem:[%s0 + $0x50] sm:$0xff]
    %v41 = vld [vmem:[%s0 + $0x58] sm:$0xff]
    %v42 = vld [vmem:[%s0 + $0x60] sm:$0xff]
    %v43 = vld [vmem:[%s0 + $0x68] sm:$0xff]
    %v44 = vld [vmem:[%s0 + $0x70] sm:$0xff]
    %v45 = vld [vmem:[%s0 + $0x78] sm:$0xff]
    %v46 = vld [vmem:[#allocation2] sm:$0xff]
    %v47 = vld [vmem:[#allocation2 + $0x8] sm:$0xff]
    %v48 = vld [vmem:[#allocation2 + $0x10] sm:$0xff]
    %v49 = vld [vmem:[#allocation2 + $0x18] sm:$0xff]
    %v50 = vld [vmem:[#allocation2 + $0x20] sm:$0xff]
    %v51 = vld [vmem:[#allocation2 + $0x28] sm:$0xff]
    %v52 = vld [vmem:[#allocation2 + $0x30] sm:$0xff]
    %v53 = vld [vmem:[#allocation2 + $0x38] sm:$0xff]
    %v54 = vld [vmem:[%s2] ss:$8 sm:$0x3]
    %v55 = vpack.c.bf16 %v31, %v30
    %v56 = vpack.c.bf16 %v33, %v32
    %v57 = vpack.c.bf16 %v35, %v34
    %v58 = vpack.c.bf16 %v37, %v36
    %v59 = vpack.c.bf16 %v39, %v38
    %v60 = vpack.c.bf16 %v41, %v40
    %v61 = vpack.c.bf16 %v43, %v42
    %v62 = vpack.c.bf16 %v45, %v44
    %v64 = vlaneseq
    %v65 = vshrl.u32 %v64, 7
    %v66 = vsub.s32 0, %v65
    %v67 = vrot.slane %v54, %v66
    %v68 = vlaneseq
    %v69 = vshrl.u32 %v68, 7
    %v70 = vsub.s32 1, %v69
    %v71 = vrot.slane %v54, %v70
    %v82 = vunpack.c.l.b16 %v46
    %v83 = vunpack.c.h.b16 %v46
    %v84 = vunpack.c.l.b16 %v47
    %v85 = vunpack.c.h.b16 %v47
    %v86 = vunpack.c.l.b16 %v48
    %v87 = vunpack.c.h.b16 %v48
    %v88 = vunpack.c.l.b16 %v49
    %v89 = vunpack.c.h.b16 %v49
    %v90 = vunpack.c.l.b16 %v50
    %v91 = vunpack.c.h.b16 %v50
    %v92 = vunpack.c.l.b16 %v51
    %v93 = vunpack.c.h.b16 %v51
    %v94 = vunpack.c.l.b16 %v52
    %v95 = vunpack.c.h.b16 %v52
    %v96 = vunpack.c.l.b16 %v53
    %v97 = vunpack.c.h.b16 %v53
    %v98 = vpack.c.b16 %v84, %v82
    %v99 = vpack.c.b16 %v85, %v83
    %v100 = vpack.c.b16 %v88, %v86
    %v101 = vpack.c.b16 %v89, %v87
    %v102 = vpack.c.b16 %v92, %v90
    %v103 = vpack.c.b16 %v93, %v91
    %v104 = vpack.c.b16 %v96, %v94
    %v105 = vpack.c.b16 %v97, %v95
    %vm114 = vcmask 523264
    %v116 = vsel %vm114, %v55, 0
    %v119 = vsel %vm114, %v56, 0
    %v122 = vsel %vm114, %v57, 0
    %v125 = vsel %vm114, %v58, 0
    %v128 = vsel %vm114, %v59, 0
    %v131 = vsel %vm114, %v60, 0
    %v134 = vsel %vm114, %v61, 0
    %v137 = vsel %vm114, %v62, 0
    %139 = vmatprep.subr.bf16.mxu0 0
    %140 = vmatpush1.bf16.msra.mxu0 0
    %141 = vmatprep.subr.bf16.mxu0 0
    %142 = vmatpush1.bf16.msra.mxu0 0
    %143 = vmatprep.subr.bf16.mxu0 0
    %144 = vmatpush1.bf16.msra.mxu0 0
    %145 = vmatprep.subr.bf16.mxu0 0
    %146 = vmatpush1.bf16.msra.mxu0 0
    %147 = vmatprep.subr.bf16.mxu0 %v105
    %148 = vmatpush1.bf16.msra.mxu0 %v104
    %149 = vmatprep.subr.bf16.mxu0 %v103
    %150 = vmatpush1.bf16.msra.mxu0 %v102
    %151 = vmatprep.subr.bf16.mxu0 %v101
    %152 = vmatpush1.bf16.msra.mxu0 %v100
    %153 = vmatprep.subr.bf16.mxu0 %v99
    %154 = vmatpush1.bf16.msra.mxu0 %v98
    %155 = vmatprep.subr.bf16.mxu0 0
    %156 = vmatpush2.bf16.msra.mxu0 0
    %157 = vmatprep.subr.bf16.mxu0 0
    %158 = vmatpush2.bf16.msra.mxu0 0
    %159 = vmatprep.subr.bf16.mxu0 0
    %160 = vmatpush2.bf16.msra.mxu0 0
    %161 = vmatprep.subr.bf16.mxu0 0
    %162 = vmatpush2.bf16.msra.mxu0 0
    %163 = vmatprep.subr.bf16.mxu0 0
    %164 = vmatpush2.bf16.msra.mxu0 0
    %165 = vmatprep.subr.bf16.mxu0 0
    %166 = vmatpush2.bf16.msra.mxu0 0
    %167 = vmatprep.subr.bf16.mxu0 0
    %168 = vmatpush2.bf16.msra.mxu0 0
    %169 = vmatprep.subr.bf16.mxu0 0
    %170 = vmatpush2.bf16.msra.mxu0 0
    %171 = vmatprep.mubr.bf16.mxu0 0
    %172 = vmatmul.mubr.bf16.gmra.mxu0 %v116
    %v173 = vpop.f32.mrf.mxu0
    %v174 = vadd.f32 %v67, %v173
    %v175 = vpop.f32.mrf.mxu0
    %v176 = vadd.f32 %v71, %v175
    %v177 = vpop.f32.mrf.mxu0
    %v178 = vadd.f32 %v67, %v177
    %v179 = vpop.f32.mrf.mxu0
    %v180 = vadd.f32 %v71, %v179
    %181 = vmatprep.mubr.bf16.mxu0 0
    %182 = vmatmul.mubr.bf16.gmra.mxu0 %v119
    %v183 = vpop.f32.mrf.mxu0
    %v184 = vadd.f32 %v67, %v183
    %v185 = vpop.f32.mrf.mxu0
    %v186 = vadd.f32 %v71, %v185
    %v187 = vpop.f32.mrf.mxu0
    %v188 = vadd.f32 %v67, %v187
    %v189 = vpop.f32.mrf.mxu0
    %v190 = vadd.f32 %v71, %v189
    %191 = vmatprep.mubr.bf16.mxu0 0
    %192 = vmatmul.mubr.bf16.gmra.mxu0 %v122
    %v193 = vpop.f32.mrf.mxu0
    %v194 = vadd.f32 %v67, %v193
    %v195 = vpop.f32.mrf.mxu0
    %v196 = vadd.f32 %v71, %v195
    %v197 = vpop.f32.mrf.mxu0
    %v198 = vadd.f32 %v67, %v197
    %v199 = vpop.f32.mrf.mxu0
    %v200 = vadd.f32 %v71, %v199
    %201 = vmatprep.mubr.bf16.mxu0 0
    %202 = vmatmul.mubr.bf16.gmra.mxu0 %v125
    %v203 = vpop.f32.mrf.mxu0
    %v204 = vadd.f32 %v67, %v203
    %v205 = vpop.f32.mrf.mxu0
    %v206 = vadd.f32 %v71, %v205
    %v207 = vpop.f32.mrf.mxu0
    %v208 = vadd.f32 %v67, %v207
    %v209 = vpop.f32.mrf.mxu0
    %v210 = vadd.f32 %v71, %v209
    %211 = vmatprep.mubr.bf16.mxu0 0
    %212 = vmatmul.mubr.bf16.gmra.mxu0 %v128
    %v213 = vpop.f32.mrf.mxu0
    %v214 = vadd.f32 %v67, %v213
    %v215 = vpop.f32.mrf.mxu0
    %v216 = vadd.f32 %v71, %v215
    %v217 = vpop.f32.mrf.mxu0
    %v218 = vadd.f32 %v67, %v217
    %v219 = vpop.f32.mrf.mxu0
    %v220 = vadd.f32 %v71, %v219
    %221 = vmatprep.mubr.bf16.mxu0 0
    %222 = vmatmul.mubr.bf16.gmra.mxu0 %v131
    %v223 = vpop.f32.mrf.mxu0
    %v224 = vadd.f32 %v67, %v223
    %v225 = vpop.f32.mrf.mxu0
    %v226 = vadd.f32 %v71, %v225
    %v227 = vpop.f32.mrf.mxu0
    %v228 = vadd.f32 %v67, %v227
    %v229 = vpop.f32.mrf.mxu0
    %v230 = vadd.f32 %v71, %v229
    %231 = vmatprep.mubr.bf16.mxu0 0
    %232 = vmatmul.mubr.bf16.gmra.mxu0 %v134
    %v233 = vpop.f32.mrf.mxu0
    %v234 = vadd.f32 %v67, %v233
    %v235 = vpop.f32.mrf.mxu0
    %v236 = vadd.f32 %v71, %v235
    %v237 = vpop.f32.mrf.mxu0
    %v238 = vadd.f32 %v67, %v237
    %v239 = vpop.f32.mrf.mxu0
    %v240 = vadd.f32 %v71, %v239
    %241 = vmatprep.mubr.bf16.mxu0 0
    %242 = vmatmul.mubr.bf16.gmra.mxu0 %v137
    %v243 = vpop.f32.mrf.mxu0
    %v244 = vadd.f32 %v67, %v243
    %v245 = vpop.f32.mrf.mxu0
    %v246 = vadd.f32 %v71, %v245
    %v247 = vpop.f32.mrf.mxu0
    %v248 = vadd.f32 %v67, %v247
    %v249 = vpop.f32.mrf.mxu0
    %v250 = vadd.f32 %v71, %v249
    %251 = vdwg.mxu0
    %v252 = vmax.f32 %v174, 0.0
    %v253 = vmax.f32 %v178, 0.0
    %v254 = vmax.f32 %v184, 0.0
    %v255 = vmax.f32 %v188, 0.0
    %v256 = vmax.f32 %v194, 0.0
    %v257 = vmax.f32 %v198, 0.0
    %v258 = vmax.f32 %v204, 0.0
    %v259 = vmax.f32 %v208, 0.0
    %v260 = vmax.f32 %v214, 0.0
    %v261 = vmax.f32 %v218, 0.0
    %v262 = vmax.f32 %v224, 0.0
    %v263 = vmax.f32 %v228, 0.0
    %v264 = vmax.f32 %v234, 0.0
    %v265 = vmax.f32 %v238, 0.0
    %v266 = vmax.f32 %v244, 0.0
    %v267 = vmax.f32 %v248, 0.0
    %v268 = vld [vmem:[#allocation2 + $0x40] sm:$0xf]
    %v269 = vld [vmem:[#allocation2 + $0x48] sm:$0xf]
    %v270 = vld [vmem:[#allocation2 + $0x50] sm:$0xf]
    %v271 = vld [vmem:[#allocation2 + $0x58] sm:$0xf]
    %v272 = vld [vmem:[#allocation2 + $0x60] sm:$0xf]
    %v273 = vld [vmem:[#allocation2 + $0x68] sm:$0xf]
    %v274 = vld [vmem:[#allocation2 + $0x70] sm:$0xf]
    %v275 = vld [vmem:[#allocation2 + $0x78] sm:$0xf]
    %v276 = vld [vmem:[#allocation2 + $0x80] sm:$0xf]
    %v277 = vld [vmem:[#allocation2 + $0x88] sm:$0xf]
    %v278 = vld [vmem:[#allocation2 + $0x90] sm:$0xf]
    %v279 = vld [vmem:[#allocation2 + $0x98] sm:$0xf]
    %v280 = vld [vmem:[#allocation2 + $0xa0] sm:$0xf]
    %v281 = vld [vmem:[#allocation2 + $0xa8] sm:$0xf]
    %v282 = vld [vmem:[#allocation2 + $0xb0] sm:$0xf]
    %v283 = vld [vmem:[#allocation2 + $0xb8] sm:$0xf]
    %v284 = vld [vmem:[%s2 + $0x1] ss:$0 sm:$0xff]
    %v285 = vpack.c.bf16 %v253, %v252
    %v286 = vpack.c.bf16 %v255, %v254
    %v287 = vpack.c.bf16 %v257, %v256
    %v288 = vpack.c.bf16 %v259, %v258
    %v289 = vpack.c.bf16 %v261, %v260
    %v290 = vpack.c.bf16 %v263, %v262
    %v291 = vpack.c.bf16 %v265, %v264
    %v292 = vpack.c.bf16 %v267, %v266
    %v309 = vunpack.c.l.b16 %v268
    %v310 = vunpack.c.l.b16 %v269
    %v311 = vunpack.c.l.b16 %v270
    %v312 = vunpack.c.l.b16 %v271
    %v313 = vunpack.c.l.b16 %v272
    %v314 = vunpack.c.l.b16 %v273
    %v315 = vunpack.c.l.b16 %v274
    %v316 = vunpack.c.l.b16 %v275
    %v317 = vunpack.c.l.b16 %v276
    %v318 = vunpack.c.l.b16 %v277
    %v319 = vunpack.c.l.b16 %v278
    %v320 = vunpack.c.l.b16 %v279
    %v321 = vunpack.c.l.b16 %v280
    %v322 = vunpack.c.l.b16 %v281
    %v323 = vunpack.c.l.b16 %v282
    %v324 = vunpack.c.l.b16 %v283
    %v325 = vpack.c.b16 %v310, %v309
    %v326 = vpack.c.b16 %v312, %v311
    %v327 = vpack.c.b16 %v314, %v313
    %v328 = vpack.c.b16 %v316, %v315
    %v329 = vpack.c.b16 %v318, %v317
    %v330 = vpack.c.b16 %v320, %v319
    %v331 = vpack.c.b16 %v322, %v321
    %v332 = vpack.c.b16 %v324, %v323
    %341 = vmatprep.subr.bf16.mxu0 0
    %342 = vmatpush1.bf16.msra.mxu0 %v332
    %343 = vmatprep.subr.bf16.mxu0 0
    %344 = vmatpush1.bf16.msra.mxu0 %v331
    %345 = vmatprep.subr.bf16.mxu0 0
    %346 = vmatpush1.bf16.msra.mxu0 %v330
    %347 = vmatprep.subr.bf16.mxu0 0
    %348 = vmatpush1.bf16.msra.mxu0 %v329
    %349 = vmatprep.subr.bf16.mxu0 0
    %350 = vmatpush1.bf16.msra.mxu0 %v328
    %351 = vmatprep.subr.bf16.mxu0 0
    %352 = vmatpush1.bf16.msra.mxu0 %v327
    %353 = vmatprep.subr.bf16.mxu0 0
    %354 = vmatpush1.bf16.msra.mxu0 %v326
    %355 = vmatprep.subr.bf16.mxu0 0
    %356 = vmatpush1.bf16.msra.mxu0 %v325
    %357 = vmatprep.subr.bf16.mxu0 0
    %358 = vmatpush2.bf16.msra.mxu0 0
    %359 = vmatprep.subr.bf16.mxu0 0
    %360 = vmatpush2.bf16.msra.mxu0 0
    %361 = vmatprep.subr.bf16.mxu0 0
    %362 = vmatpush2.bf16.msra.mxu0 0
    %363 = vmatprep.subr.bf16.mxu0 0
    %364 = vmatpush2.bf16.msra.mxu0 0
    %365 = vmatprep.subr.bf16.mxu0 0
    %366 = vmatpush2.bf16.msra.mxu0 0
    %367 = vmatprep.subr.bf16.mxu0 0
    %368 = vmatpush2.bf16.msra.mxu0 0
    %369 = vmatprep.subr.bf16.mxu0 0
    %370 = vmatpush2.bf16.msra.mxu0 0
    %371 = vmatprep.subr.bf16.mxu0 0
    %372 = vmatpush2.bf16.msra.mxu0 0
    %373 = vmatprep.mubr.bf16.mxu0 0
    %374 = vmatmul.mubr.bf16.gmra.mxu0 %v285
    %v375 = vpop.f32.mrf.mxu0
    %v376 = vadd.f32 %v284, %v375
    %v377 = vpop.f32.mrf.mxu0
    %v378 = vpop.f32.mrf.mxu0
    %v379 = vadd.f32 %v284, %v378
    %v380 = vpop.f32.mrf.mxu0
    %381 = vmatprep.mubr.bf16.mxu0 0
    %382 = vmatmul.mubr.bf16.gmra.mxu0 %v286
    %v383 = vpop.f32.mrf.mxu0
    %v384 = vadd.f32 %v284, %v383
    %v385 = vpop.f32.mrf.mxu0
    %v386 = vpop.f32.mrf.mxu0
    %v387 = vadd.f32 %v284, %v386
    %v388 = vpop.f32.mrf.mxu0
    %389 = vmatprep.mubr.bf16.mxu0 0
    %390 = vmatmul.mubr.bf16.gmra.mxu0 %v287
    %v391 = vpop.f32.mrf.mxu0
    %v392 = vadd.f32 %v284, %v391
    %v393 = vpop.f32.mrf.mxu0
    %v394 = vpop.f32.mrf.mxu0
    %v395 = vadd.f32 %v284, %v394
    %v396 = vpop.f32.mrf.mxu0
    %397 = vmatprep.mubr.bf16.mxu0 0
    %398 = vmatmul.mubr.bf16.gmra.mxu0 %v288
    %v399 = vpop.f32.mrf.mxu0
    %v400 = vadd.f32 %v284, %v399
    %v401 = vpop.f32.mrf.mxu0
    %v402 = vpop.f32.mrf.mxu0
    %v403 = vadd.f32 %v284, %v402
    %v404 = vpop.f32.mrf.mxu0
    %405 = vmatprep.mubr.bf16.mxu0 0
    %406 = vmatmul.mubr.bf16.gmra.mxu0 %v289
    %v407 = vpop.f32.mrf.mxu0
    %v408 = vadd.f32 %v284, %v407
    %v409 = vpop.f32.mrf.mxu0
    %v410 = vpop.f32.mrf.mxu0
    %v411 = vadd.f32 %v284, %v410
    %v412 = vpop.f32.mrf.mxu0
    %413 = vmatprep.mubr.bf16.mxu0 0
    %414 = vmatmul.mubr.bf16.gmra.mxu0 %v290
    %v415 = vpop.f32.mrf.mxu0
    %v416 = vadd.f32 %v284, %v415
    %v417 = vpop.f32.mrf.mxu0
    %v418 = vpop.f32.mrf.mxu0
    %v419 = vadd.f32 %v284, %v418
    %v420 = vpop.f32.mrf.mxu0
    %421 = vmatprep.mubr.bf16.mxu0 0
    %422 = vmatmul.mubr.bf16.gmra.mxu0 %v291
    %v423 = vpop.f32.mrf.mxu0
    %v424 = vadd.f32 %v284, %v423
    %v425 = vpop.f32.mrf.mxu0
    %v426 = vpop.f32.mrf.mxu0
    %v427 = vadd.f32 %v284, %v426
    %v428 = vpop.f32.mrf.mxu0
    %429 = vmatprep.mubr.bf16.mxu0 0
    %430 = vmatmul.mubr.bf16.gmra.mxu0 %v292
    %v431 = vpop.f32.mrf.mxu0
    %v432 = vadd.f32 %v284, %v431
    %v433 = vpop.f32.mrf.mxu0
    %v434 = vpop.f32.mrf.mxu0
    %v435 = vadd.f32 %v284, %v434
    %v436 = vpop.f32.mrf.mxu0
    %437 = vdwg.mxu0
    %v438 = vadd.f32 %v376, %v176
    %v439 = vadd.f32 %v379, %v180
    %v440 = vadd.f32 %v384, %v186
    %v441 = vadd.f32 %v387, %v190
    %v442 = vadd.f32 %v392, %v196
    %v443 = vadd.f32 %v395, %v200
    %v444 = vadd.f32 %v400, %v206
    %v445 = vadd.f32 %v403, %v210
    %v446 = vadd.f32 %v408, %v216
    %v447 = vadd.f32 %v411, %v220
    %v448 = vadd.f32 %v416, %v226
    %v449 = vadd.f32 %v419, %v230
    %v450 = vadd.f32 %v424, %v236
    %v451 = vadd.f32 %v427, %v240
    %v452 = vadd.f32 %v432, %v246
    %v453 = vadd.f32 %v435, %v250
    %v454 = vmax.f32 %v438, 0.0
    %v455 = vmax.f32 %v439, 0.0
    %v456 = vmax.f32 %v440, 0.0
    %v457 = vmax.f32 %v441, 0.0
    %v458 = vmax.f32 %v442, 0.0
    %v459 = vmax.f32 %v443, 0.0
    %v460 = vmax.f32 %v444, 0.0
    %v461 = vmax.f32 %v445, 0.0
    %v462 = vmax.f32 %v446, 0.0
    %v463 = vmax.f32 %v447, 0.0
    %v464 = vmax.f32 %v448, 0.0
    %v465 = vmax.f32 %v449, 0.0
    %v466 = vmax.f32 %v450, 0.0
    %v467 = vmax.f32 %v451, 0.0
    %v468 = vmax.f32 %v452, 0.0
    %v469 = vmax.f32 %v453, 0.0
    %v470 = vld [vmem:[#allocation2 + $0xc0] sm:$0xff]
    %v471 = vld [vmem:[#allocation2 + $0xc8] sm:$0xff]
    %v472 = vld [vmem:[#allocation2 + $0xd0] sm:$0xff]
    %v473 = vld [vmem:[#allocation2 + $0xd8] sm:$0xff]
    %v474 = vld [vmem:[#allocation2 + $0xe0] sm:$0xff]
    %v475 = vld [vmem:[#allocation2 + $0xe8] sm:$0xff]
    %v476 = vld [vmem:[#allocation2 + $0xf0] sm:$0xff]
    %v477 = vld [vmem:[#allocation2 + $0xf8] sm:$0xff]
    %v478 = vld [vmem:[#allocation2 + $0x100] sm:$0xff]
    %v479 = vld [vmem:[#allocation2 + $0x108] sm:$0xff]
    %v480 = vld [vmem:[#allocation2 + $0x110] sm:$0xff]
    %v481 = vld [vmem:[#allocation2 + $0x118] sm:$0xff]
    %v482 = vld [vmem:[#allocation2 + $0x120] sm:$0xff]
    %v483 = vld [vmem:[#allocation2 + $0x128] sm:$0xff]
    %v484 = vld [vmem:[#allocation2 + $0x130] sm:$0xff]
    %v485 = vld [vmem:[#allocation2 + $0x138] sm:$0xff]
    %s486 = scalar_lea.vmem %s2, 2
    %v487 = vld [vmem:[%s486] ss:$8 sm:$0x3]
    %v488 = vpack.c.bf16 %v455, %v454
    %v489 = vpack.c.bf16 %v457, %v456
    %v490 = vpack.c.bf16 %v459, %v458
    %v491 = vpack.c.bf16 %v461, %v460
    %v492 = vpack.c.bf16 %v463, %v462
    %v493 = vpack.c.bf16 %v465, %v464
    %v494 = vpack.c.bf16 %v467, %v466
    %v495 = vpack.c.bf16 %v469, %v468
    %v497 = vlaneseq
    %v498 = vshrl.u32 %v497, 7
    %v499 = vsub.s32 0, %v498
    %v500 = vrot.slane %v487, %v499
    %v501 = vlaneseq
    %v502 = vshrl.u32 %v501, 7
    %v503 = vsub.s32 1, %v502
    %v504 = vrot.slane %v487, %v503
    %v523 = vunpack.c.l.b16 %v470
    %v524 = vunpack.c.h.b16 %v470
    %v525 = vunpack.c.l.b16 %v471
    %v526 = vunpack.c.h.b16 %v471
    %v527 = vunpack.c.l.b16 %v472
    %v528 = vunpack.c.h.b16 %v472
    %v529 = vunpack.c.l.b16 %v473
    %v530 = vunpack.c.h.b16 %v473
    %v531 = vunpack.c.l.b16 %v474
    %v532 = vunpack.c.h.b16 %v474
    %v533 = vunpack.c.l.b16 %v475
    %v534 = vunpack.c.h.b16 %v475
    %v535 = vunpack.c.l.b16 %v476
    %v536 = vunpack.c.h.b16 %v476
    %v537 = vunpack.c.l.b16 %v477
    %v538 = vunpack.c.h.b16 %v477
    %v539 = vunpack.c.l.b16 %v478
    %v540 = vunpack.c.h.b16 %v478
    %v541 = vunpack.c.l.b16 %v479
    %v542 = vunpack.c.h.b16 %v479
    %v543 = vunpack.c.l.b16 %v480
    %v544 = vunpack.c.h.b16 %v480
    %v545 = vunpack.c.l.b16 %v481
    %v546 = vunpack.c.h.b16 %v481
    %v547 = vunpack.c.l.b16 %v482
    %v548 = vunpack.c.h.b16 %v482
    %v549 = vunpack.c.l.b16 %v483
    %v550 = vunpack.c.h.b16 %v483
    %v551 = vunpack.c.l.b16 %v484
    %v552 = vunpack.c.h.b16 %v484
    %v553 = vunpack.c.l.b16 %v485
    %v554 = vunpack.c.h.b16 %v485
    %v555 = vpack.c.b16 %v525, %v523
    %v556 = vpack.c.b16 %v526, %v524
    %v557 = vpack.c.b16 %v529, %v527
    %v558 = vpack.c.b16 %v530, %v528
    %v559 = vpack.c.b16 %v533, %v531
    %v560 = vpack.c.b16 %v534, %v532
    %v561 = vpack.c.b16 %v537, %v535
    %v562 = vpack.c.b16 %v538, %v536
    %v563 = vpack.c.b16 %v541, %v539
    %v564 = vpack.c.b16 %v542, %v540
    %v565 = vpack.c.b16 %v545, %v543
    %v566 = vpack.c.b16 %v546, %v544
    %v567 = vpack.c.b16 %v549, %v547
    %v568 = vpack.c.b16 %v550, %v548
    %v569 = vpack.c.b16 %v553, %v551
    %v570 = vpack.c.b16 %v554, %v552
    %587 = vmatprep.subr.bf16.mxu0 %v570
    %588 = vmatpush1.bf16.msra.mxu0 %v569
    %589 = vmatprep.subr.bf16.mxu0 %v568
    %590 = vmatpush1.bf16.msra.mxu0 %v567
    %591 = vmatprep.subr.bf16.mxu0 %v566
    %592 = vmatpush1.bf16.msra.mxu0 %v565
    %593 = vmatprep.subr.bf16.mxu0 %v564
    %594 = vmatpush1.bf16.msra.mxu0 %v563
    %595 = vmatprep.subr.bf16.mxu0 %v562
    %596 = vmatpush1.bf16.msra.mxu0 %v561
    %597 = vmatprep.subr.bf16.mxu0 %v560
    %598 = vmatpush1.bf16.msra.mxu0 %v559
    %599 = vmatprep.subr.bf16.mxu0 %v558
    %600 = vmatpush1.bf16.msra.mxu0 %v557
    %601 = vmatprep.subr.bf16.mxu0 %v556
    %602 = vmatpush1.bf16.msra.mxu0 %v555
    %603 = vmatprep.subr.bf16.mxu0 0
    %604 = vmatpush2.bf16.msra.mxu0 0
    %605 = vmatprep.subr.bf16.mxu0 0
    %606 = vmatpush2.bf16.msra.mxu0 0
    %607 = vmatprep.subr.bf16.mxu0 0
    %608 = vmatpush2.bf16.msra.mxu0 0
    %609 = vmatprep.subr.bf16.mxu0 0
    %610 = vmatpush2.bf16.msra.mxu0 0
    %611 = vmatprep.subr.bf16.mxu0 0
    %612 = vmatpush2.bf16.msra.mxu0 0
    %613 = vmatprep.subr.bf16.mxu0 0
    %614 = vmatpush2.bf16.msra.mxu0 0
    %615 = vmatprep.subr.bf16.mxu0 0
    %616 = vmatpush2.bf16.msra.mxu0 0
    %617 = vmatprep.subr.bf16.mxu0 0
    %618 = vmatpush2.bf16.msra.mxu0 0
    %619 = vmatprep.mubr.bf16.mxu0 0
    %620 = vmatmul.mubr.bf16.gmra.mxu0 %v488
    %v621 = vpop.f32.mrf.mxu0
    %v622 = vadd.f32 %v500, %v621
    %v623 = vpop.f32.mrf.mxu0
    %v624 = vadd.f32 %v504, %v623
    %v625 = vpop.f32.mrf.mxu0
    %v626 = vadd.f32 %v500, %v625
    %v627 = vpop.f32.mrf.mxu0
    %v628 = vadd.f32 %v504, %v627
    %629 = vmatprep.mubr.bf16.mxu0 0
    %630 = vmatmul.mubr.bf16.gmra.mxu0 %v489
    %v631 = vpop.f32.mrf.mxu0
    %v632 = vadd.f32 %v500, %v631
    %v633 = vpop.f32.mrf.mxu0
    %v634 = vadd.f32 %v504, %v633
    %v635 = vpop.f32.mrf.mxu0
    %v636 = vadd.f32 %v500, %v635
    %v637 = vpop.f32.mrf.mxu0
    %v638 = vadd.f32 %v504, %v637
    %639 = vmatprep.mubr.bf16.mxu0 0
    %640 = vmatmul.mubr.bf16.gmra.mxu0 %v490
    %v641 = vpop.f32.mrf.mxu0
    %v642 = vadd.f32 %v500, %v641
    %v643 = vpop.f32.mrf.mxu0
    %v644 = vadd.f32 %v504, %v643
    %v645 = vpop.f32.mrf.mxu0
    %v646 = vadd.f32 %v500, %v645
    %v647 = vpop.f32.mrf.mxu0
    %v648 = vadd.f32 %v504, %v647
    %649 = vmatprep.mubr.bf16.mxu0 0
    %650 = vmatmul.mubr.bf16.gmra.mxu0 %v491
    %v651 = vpop.f32.mrf.mxu0
    %v652 = vadd.f32 %v500, %v651
    %v653 = vpop.f32.mrf.mxu0
    %v654 = vadd.f32 %v504, %v653
    %v655 = vpop.f32.mrf.mxu0
    %v656 = vadd.f32 %v500, %v655
    %v657 = vpop.f32.mrf.mxu0
    %v658 = vadd.f32 %v504, %v657
    %659 = vmatprep.mubr.bf16.mxu0 0
    %660 = vmatmul.mubr.bf16.gmra.mxu0 %v492
    %v661 = vpop.f32.mrf.mxu0
    %v662 = vadd.f32 %v500, %v661
    %v663 = vpop.f32.mrf.mxu0
    %v664 = vadd.f32 %v504, %v663
    %v665 = vpop.f32.mrf.mxu0
    %v666 = vadd.f32 %v500, %v665
    %v667 = vpop.f32.mrf.mxu0
    %v668 = vadd.f32 %v504, %v667
    %669 = vmatprep.mubr.bf16.mxu0 0
    %670 = vmatmul.mubr.bf16.gmra.mxu0 %v493
    %v671 = vpop.f32.mrf.mxu0
    %v672 = vadd.f32 %v500, %v671
    %v673 = vpop.f32.mrf.mxu0
    %v674 = vadd.f32 %v504, %v673
    %v675 = vpop.f32.mrf.mxu0
    %v676 = vadd.f32 %v500, %v675
    %v677 = vpop.f32.mrf.mxu0
    %v678 = vadd.f32 %v504, %v677
    %679 = vmatprep.mubr.bf16.mxu0 0
    %680 = vmatmul.mubr.bf16.gmra.mxu0 %v494
    %v681 = vpop.f32.mrf.mxu0
    %v682 = vadd.f32 %v500, %v681
    %v683 = vpop.f32.mrf.mxu0
    %v684 = vadd.f32 %v504, %v683
    %v685 = vpop.f32.mrf.mxu0
    %v686 = vadd.f32 %v500, %v685
    %v687 = vpop.f32.mrf.mxu0
    %v688 = vadd.f32 %v504, %v687
    %689 = vmatprep.mubr.bf16.mxu0 0
    %690 = vmatmul.mubr.bf16.gmra.mxu0 %v495
    %v691 = vpop.f32.mrf.mxu0
    %v692 = vadd.f32 %v500, %v691
    %v693 = vpop.f32.mrf.mxu0
    %v694 = vadd.f32 %v504, %v693
    %v695 = vpop.f32.mrf.mxu0
    %v696 = vadd.f32 %v500, %v695
    %v697 = vpop.f32.mrf.mxu0
    %v698 = vadd.f32 %v504, %v697
    %699 = vdwg.mxu0
    %v700 = vmax.f32 %v622, 0.0
    %v701 = vmax.f32 %v626, 0.0
    %v702 = vmax.f32 %v632, 0.0
    %v703 = vmax.f32 %v636, 0.0
    %v704 = vmax.f32 %v642, 0.0
    %v705 = vmax.f32 %v646, 0.0
    %v706 = vmax.f32 %v652, 0.0
    %v707 = vmax.f32 %v656, 0.0
    %v708 = vmax.f32 %v662, 0.0
    %v709 = vmax.f32 %v666, 0.0
    %v710 = vmax.f32 %v672, 0.0
    %v711 = vmax.f32 %v676, 0.0
    %v712 = vmax.f32 %v682, 0.0
    %v713 = vmax.f32 %v686, 0.0
    %v714 = vmax.f32 %v692, 0.0
    %v715 = vmax.f32 %v696, 0.0
    %v716 = vld [vmem:[#allocation2 + $0x140] sm:$0xf]
    %v717 = vld [vmem:[#allocation2 + $0x148] sm:$0xf]
    %v718 = vld [vmem:[#allocation2 + $0x150] sm:$0xf]
    %v719 = vld [vmem:[#allocation2 + $0x158] sm:$0xf]
    %v720 = vld [vmem:[#allocation2 + $0x160] sm:$0xf]
    %v721 = vld [vmem:[#allocation2 + $0x168] sm:$0xf]
    %v722 = vld [vmem:[#allocation2 + $0x170] sm:$0xf]
    %v723 = vld [vmem:[#allocation2 + $0x178] sm:$0xf]
    %v724 = vld [vmem:[%s2 + $0x3] ss:$0 sm:$0xff]
    %v725 = vpack.c.bf16 %v701, %v700
    %v726 = vpack.c.bf16 %v703, %v702
    %v727 = vpack.c.bf16 %v705, %v704
    %v728 = vpack.c.bf16 %v707, %v706
    %v729 = vpack.c.bf16 %v709, %v708
    %v730 = vpack.c.bf16 %v711, %v710
    %v731 = vpack.c.bf16 %v713, %v712
    %v732 = vpack.c.bf16 %v715, %v714
    %v741 = vunpack.c.l.b16 %v716
    %v742 = vunpack.c.l.b16 %v717
    %v743 = vunpack.c.l.b16 %v718
    %v744 = vunpack.c.l.b16 %v719
    %v745 = vunpack.c.l.b16 %v720
    %v746 = vunpack.c.l.b16 %v721
    %v747 = vunpack.c.l.b16 %v722
    %v748 = vunpack.c.l.b16 %v723
    %v749 = vpack.c.b16 %v742, %v741
    %v750 = vpack.c.b16 %v744, %v743
    %v751 = vpack.c.b16 %v746, %v745
    %v752 = vpack.c.b16 %v748, %v747
    %v758 = vsel %vm114, %v725, 0
    %v761 = vsel %vm114, %v726, 0
    %v764 = vsel %vm114, %v727, 0
    %v767 = vsel %vm114, %v728, 0
    %v770 = vsel %vm114, %v729, 0
    %v773 = vsel %vm114, %v730, 0
    %v776 = vsel %vm114, %v731, 0
    %v779 = vsel %vm114, %v732, 0
    %781 = vmatprep.subr.bf16.mxu0 0
    %782 = vmatpush1.bf16.msra.mxu0 0
    %783 = vmatprep.subr.bf16.mxu0 0
    %784 = vmatpush1.bf16.msra.mxu0 0
    %785 = vmatprep.subr.bf16.mxu0 0
    %786 = vmatpush1.bf16.msra.mxu0 0
    %787 = vmatprep.subr.bf16.mxu0 0
    %788 = vmatpush1.bf16.msra.mxu0 0
    %789 = vmatprep.subr.bf16.mxu0 0
    %790 = vmatpush1.bf16.msra.mxu0 %v752
    %791 = vmatprep.subr.bf16.mxu0 0
    %792 = vmatpush1.bf16.msra.mxu0 %v751
    %793 = vmatprep.subr.bf16.mxu0 0
    %794 = vmatpush1.bf16.msra.mxu0 %v750
    %795 = vmatprep.subr.bf16.mxu0 0
    %796 = vmatpush1.bf16.msra.mxu0 %v749
    %797 = vmatprep.subr.bf16.mxu0 0
    %798 = vmatpush2.bf16.msra.mxu0 0
    %799 = vmatprep.subr.bf16.mxu0 0
    %800 = vmatpush2.bf16.msra.mxu0 0
    %801 = vmatprep.subr.bf16.mxu0 0
    %802 = vmatpush2.bf16.msra.mxu0 0
    %803 = vmatprep.subr.bf16.mxu0 0
    %804 = vmatpush2.bf16.msra.mxu0 0
    %805 = vmatprep.subr.bf16.mxu0 0
    %806 = vmatpush2.bf16.msra.mxu0 0
    %807 = vmatprep.subr.bf16.mxu0 0
    %808 = vmatpush2.bf16.msra.mxu0 0
    %809 = vmatprep.subr.bf16.mxu0 0
    %810 = vmatpush2.bf16.msra.mxu0 0
    %811 = vmatprep.subr.bf16.mxu0 0
    %812 = vmatpush2.bf16.msra.mxu0 0
    %813 = vmatprep.mubr.bf16.mxu0 0
    %814 = vmatmul.mubr.bf16.gmra.mxu0 %v758
    %v815 = vpop.f32.mrf.mxu0
    %v816 = vadd.f32 %v724, %v815
    %v817 = vpop.f32.mrf.mxu0
    %v818 = vpop.f32.mrf.mxu0
    %v819 = vadd.f32 %v724, %v818
    %v820 = vpop.f32.mrf.mxu0
    %821 = vmatprep.mubr.bf16.mxu0 0
    %822 = vmatmul.mubr.bf16.gmra.mxu0 %v761
    %v823 = vpop.f32.mrf.mxu0
    %v824 = vadd.f32 %v724, %v823
    %v825 = vpop.f32.mrf.mxu0
    %v826 = vpop.f32.mrf.mxu0
    %v827 = vadd.f32 %v724, %v826
    %v828 = vpop.f32.mrf.mxu0
    %829 = vmatprep.mubr.bf16.mxu0 0
    %830 = vmatmul.mubr.bf16.gmra.mxu0 %v764
    %v831 = vpop.f32.mrf.mxu0
    %v832 = vadd.f32 %v724, %v831
    %v833 = vpop.f32.mrf.mxu0
    %v834 = vpop.f32.mrf.mxu0
    %v835 = vadd.f32 %v724, %v834
    %v836 = vpop.f32.mrf.mxu0
    %837 = vmatprep.mubr.bf16.mxu0 0
    %838 = vmatmul.mubr.bf16.gmra.mxu0 %v767
    %v839 = vpop.f32.mrf.mxu0
    %v840 = vadd.f32 %v724, %v839
    %v841 = vpop.f32.mrf.mxu0
    %v842 = vpop.f32.mrf.mxu0
    %v843 = vadd.f32 %v724, %v842
    %v844 = vpop.f32.mrf.mxu0
    %845 = vmatprep.mubr.bf16.mxu0 0
    %846 = vmatmul.mubr.bf16.gmra.mxu0 %v770
    %v847 = vpop.f32.mrf.mxu0
    %v848 = vadd.f32 %v724, %v847
    %v849 = vpop.f32.mrf.mxu0
    %v850 = vpop.f32.mrf.mxu0
    %v851 = vadd.f32 %v724, %v850
    %v852 = vpop.f32.mrf.mxu0
    %853 = vmatprep.mubr.bf16.mxu0 0
    %854 = vmatmul.mubr.bf16.gmra.mxu0 %v773
    %v855 = vpop.f32.mrf.mxu0
    %v856 = vadd.f32 %v724, %v855
    %v857 = vpop.f32.mrf.mxu0
    %v858 = vpop.f32.mrf.mxu0
    %v859 = vadd.f32 %v724, %v858
    %v860 = vpop.f32.mrf.mxu0
    %861 = vmatprep.mubr.bf16.mxu0 0
    %862 = vmatmul.mubr.bf16.gmra.mxu0 %v776
    %v863 = vpop.f32.mrf.mxu0
    %v864 = vadd.f32 %v724, %v863
    %v865 = vpop.f32.mrf.mxu0
    %v866 = vpop.f32.mrf.mxu0
    %v867 = vadd.f32 %v724, %v866
    %v868 = vpop.f32.mrf.mxu0
    %869 = vmatprep.mubr.bf16.mxu0 0
    %870 = vmatmul.mubr.bf16.gmra.mxu0 %v779
    %v871 = vpop.f32.mrf.mxu0
    %v872 = vadd.f32 %v724, %v871
    %v873 = vpop.f32.mrf.mxu0
    %v874 = vpop.f32.mrf.mxu0
    %v875 = vadd.f32 %v724, %v874
    %v876 = vpop.f32.mrf.mxu0
    %877 = vdwg.mxu0
    %v878 = vadd.f32 %v816, %v624
    %v879 = vadd.f32 %v819, %v628
    %v880 = vadd.f32 %v824, %v634
    %v881 = vadd.f32 %v827, %v638
    %v882 = vadd.f32 %v832, %v644
    %v883 = vadd.f32 %v835, %v648
    %v884 = vadd.f32 %v840, %v654
    %v885 = vadd.f32 %v843, %v658
    %v886 = vadd.f32 %v848, %v664
    %v887 = vadd.f32 %v851, %v668
    %v888 = vadd.f32 %v856, %v674
    %v889 = vadd.f32 %v859, %v678
    %v890 = vadd.f32 %v864, %v684
    %v891 = vadd.f32 %v867, %v688
    %v892 = vadd.f32 %v872, %v694
    %v893 = vadd.f32 %v875, %v698
    %v894 = vmax.f32 %v878, 0.0
    %v895 = vmax.f32 %v879, 0.0
    %v896 = vmax.f32 %v880, 0.0
    %v897 = vmax.f32 %v881, 0.0
    %v898 = vmax.f32 %v882, 0.0
    %v899 = vmax.f32 %v883, 0.0
    %v900 = vmax.f32 %v884, 0.0
    %v901 = vmax.f32 %v885, 0.0
    %v902 = vmax.f32 %v886, 0.0
    %v903 = vmax.f32 %v887, 0.0
    %v904 = vmax.f32 %v888, 0.0
    %v905 = vmax.f32 %v889, 0.0
    %v906 = vmax.f32 %v890, 0.0
    %v907 = vmax.f32 %v891, 0.0
    %v908 = vmax.f32 %v892, 0.0
    %v909 = vmax.f32 %v893, 0.0
    %v910 = vld [vmem:[#allocation2 + $0x180] sm:$0xf]
    %v911 = vld [vmem:[#allocation2 + $0x188] sm:$0xf]
    %v912 = vld [vmem:[#allocation2 + $0x190] sm:$0xf]
    %v913 = vld [vmem:[#allocation2 + $0x198] sm:$0xf]
    %v914 = vld [vmem:[#allocation2 + $0x1a0] sm:$0xf]
    %v915 = vld [vmem:[#allocation2 + $0x1a8] sm:$0xf]
    %v916 = vld [vmem:[#allocation2 + $0x1b0] sm:$0xf]
    %v917 = vld [vmem:[#allocation2 + $0x1b8] sm:$0xf]
    %v918 = vld [vmem:[%s2 + $0x4] ss:$0 sm:$0xff]
    %v919 = vpack.c.bf16 %v895, %v894
    %v920 = vpack.c.bf16 %v897, %v896
    %v921 = vpack.c.bf16 %v899, %v898
    %v922 = vpack.c.bf16 %v901, %v900
    %v923 = vpack.c.bf16 %v903, %v902
    %v924 = vpack.c.bf16 %v905, %v904
    %v925 = vpack.c.bf16 %v907, %v906
    %v926 = vpack.c.bf16 %v909, %v908
    %v935 = vunpack.c.l.b16 %v910
    %v936 = vunpack.c.l.b16 %v911
    %v937 = vunpack.c.l.b16 %v912
    %v938 = vunpack.c.l.b16 %v913
    %v939 = vunpack.c.l.b16 %v914
    %v940 = vunpack.c.l.b16 %v915
    %v941 = vunpack.c.l.b16 %v916
    %v942 = vunpack.c.l.b16 %v917
    %v943 = vpack.c.b16 %v936, %v935
    %v944 = vpack.c.b16 %v938, %v937
    %v945 = vpack.c.b16 %v940, %v939
    %v946 = vpack.c.b16 %v942, %v941
    %v952 = vsel %vm114, %v919, 0
    %v955 = vsel %vm114, %v920, 0
    %v958 = vsel %vm114, %v921, 0
    %v961 = vsel %vm114, %v922, 0
    %v964 = vsel %vm114, %v923, 0
    %v967 = vsel %vm114, %v924, 0
    %v970 = vsel %vm114, %v925, 0
    %v973 = vsel %vm114, %v926, 0
    %975 = vmatprep.subr.bf16.mxu0 0
    %976 = vmatpush1.bf16.msra.mxu0 0
    %977 = vmatprep.subr.bf16.mxu0 0
    %978 = vmatpush1.bf16.msra.mxu0 0
    %979 = vmatprep.subr.bf16.mxu0 0
    %980 = vmatpush1.bf16.msra.mxu0 0
    %981 = vmatprep.subr.bf16.mxu0 0
    %982 = vmatpush1.bf16.msra.mxu0 0
    %983 = vmatprep.subr.bf16.mxu0 0
    %984 = vmatpush1.bf16.msra.mxu0 %v946
    %985 = vmatprep.subr.bf16.mxu0 0
    %986 = vmatpush1.bf16.msra.mxu0 %v945
    %987 = vmatprep.subr.bf16.mxu0 0
    %988 = vmatpush1.bf16.msra.mxu0 %v944
    %989 = vmatprep.subr.bf16.mxu0 0
    %990 = vmatpush1.bf16.msra.mxu0 %v943
    %991 = vmatprep.subr.bf16.mxu0 0
    %992 = vmatpush2.bf16.msra.mxu0 0
    %993 = vmatprep.subr.bf16.mxu0 0
    %994 = vmatpush2.bf16.msra.mxu0 0
    %995 = vmatprep.subr.bf16.mxu0 0
    %996 = vmatpush2.bf16.msra.mxu0 0
    %997 = vmatprep.subr.bf16.mxu0 0
    %998 = vmatpush2.bf16.msra.mxu0 0
    %999 = vmatprep.subr.bf16.mxu0 0
    %1000 = vmatpush2.bf16.msra.mxu0 0
    %1001 = vmatprep.subr.bf16.mxu0 0
    %1002 = vmatpush2.bf16.msra.mxu0 0
    %1003 = vmatprep.subr.bf16.mxu0 0
    %1004 = vmatpush2.bf16.msra.mxu0 0
    %1005 = vmatprep.subr.bf16.mxu0 0
    %1006 = vmatpush2.bf16.msra.mxu0 0
    %1007 = vmatprep.mubr.bf16.mxu0 0
    %1008 = vmatmul.mubr.bf16.gmra.mxu0 %v952
    %v1009 = vpop.f32.mrf.mxu0
    %v1010 = vadd.f32 %v918, %v1009
    %v1011 = vpop.f32.mrf.mxu0
    %v1012 = vpop.f32.mrf.mxu0
    %v1013 = vadd.f32 %v918, %v1012
    %v1014 = vpop.f32.mrf.mxu0
    %1015 = vmatprep.mubr.bf16.mxu0 0
    %1016 = vmatmul.mubr.bf16.gmra.mxu0 %v955
    %v1017 = vpop.f32.mrf.mxu0
    %v1018 = vadd.f32 %v918, %v1017
    %v1019 = vpop.f32.mrf.mxu0
    %v1020 = vpop.f32.mrf.mxu0
    %v1021 = vadd.f32 %v918, %v1020
    %v1022 = vpop.f32.mrf.mxu0
    %1023 = vmatprep.mubr.bf16.mxu0 0
    %1024 = vmatmul.mubr.bf16.gmra.mxu0 %v958
    %v1025 = vpop.f32.mrf.mxu0
    %v1026 = vadd.f32 %v918, %v1025
    %v1027 = vpop.f32.mrf.mxu0
    %v1028 = vpop.f32.mrf.mxu0
    %v1029 = vadd.f32 %v918, %v1028
    %v1030 = vpop.f32.mrf.mxu0
    %1031 = vmatprep.mubr.bf16.mxu0 0
    %1032 = vmatmul.mubr.bf16.gmra.mxu0 %v961
    %v1033 = vpop.f32.mrf.mxu0
    %v1034 = vadd.f32 %v918, %v1033
    %v1035 = vpop.f32.mrf.mxu0
    %v1036 = vpop.f32.mrf.mxu0
    %v1037 = vadd.f32 %v918, %v1036
    %v1038 = vpop.f32.mrf.mxu0
    %1039 = vmatprep.mubr.bf16.mxu0 0
    %1040 = vmatmul.mubr.bf16.gmra.mxu0 %v964
    %v1041 = vpop.f32.mrf.mxu0
    %v1042 = vadd.f32 %v918, %v1041
    %v1043 = vpop.f32.mrf.mxu0
    %v1044 = vpop.f32.mrf.mxu0
    %v1045 = vadd.f32 %v918, %v1044
    %v1046 = vpop.f32.mrf.mxu0
    %1047 = vmatprep.mubr.bf16.mxu0 0
    %1048 = vmatmul.mubr.bf16.gmra.mxu0 %v967
    %v1049 = vpop.f32.mrf.mxu0
    %v1050 = vadd.f32 %v918, %v1049
    %v1051 = vpop.f32.mrf.mxu0
    %v1052 = vpop.f32.mrf.mxu0
    %v1053 = vadd.f32 %v918, %v1052
    %v1054 = vpop.f32.mrf.mxu0
    %1055 = vmatprep.mubr.bf16.mxu0 0
    %1056 = vmatmul.mubr.bf16.gmra.mxu0 %v970
    %v1057 = vpop.f32.mrf.mxu0
    %v1058 = vadd.f32 %v918, %v1057
    %v1059 = vpop.f32.mrf.mxu0
    %v1060 = vpop.f32.mrf.mxu0
    %v1061 = vadd.f32 %v918, %v1060
    %v1062 = vpop.f32.mrf.mxu0
    %1063 = vmatprep.mubr.bf16.mxu0 0
    %1064 = vmatmul.mubr.bf16.gmra.mxu0 %v973
    %v1065 = vpop.f32.mrf.mxu0
    %v1066 = vadd.f32 %v918, %v1065
    %v1067 = vpop.f32.mrf.mxu0
    %v1068 = vpop.f32.mrf.mxu0
    %v1069 = vadd.f32 %v918, %v1068
    %v1070 = vpop.f32.mrf.mxu0
    %1071 = vdwg.mxu0
    %v1072 = vmax.f32 %v1010, 0.0
    %v1073 = vmax.f32 %v1013, 0.0
    %v1074 = vmax.f32 %v1018, 0.0
    %v1075 = vmax.f32 %v1021, 0.0
    %v1076 = vmax.f32 %v1026, 0.0
    %v1077 = vmax.f32 %v1029, 0.0
    %v1078 = vmax.f32 %v1034, 0.0
    %v1079 = vmax.f32 %v1037, 0.0
    %v1080 = vmax.f32 %v1042, 0.0
    %v1081 = vmax.f32 %v1045, 0.0
    %v1082 = vmax.f32 %v1050, 0.0
    %v1083 = vmax.f32 %v1053, 0.0
    %v1084 = vmax.f32 %v1058, 0.0
    %v1085 = vmax.f32 %v1061, 0.0
    %v1086 = vmax.f32 %v1066, 0.0
    %v1087 = vmax.f32 %v1069, 0.0
    %v1088 = vld [vmem:[#allocation2 + $0x1c0] sm:$0xf]
    %v1089 = vld [vmem:[#allocation2 + $0x1c8] sm:$0xf]
    %v1090 = vld [vmem:[#allocation2 + $0x1d0] sm:$0xf]
    %v1091 = vld [vmem:[#allocation2 + $0x1d8] sm:$0xf]
    %v1092 = vld [vmem:[#allocation2 + $0x1e0] sm:$0xf]
    %v1093 = vld [vmem:[#allocation2 + $0x1e8] sm:$0xf]
    %v1094 = vld [vmem:[#allocation2 + $0x1f0] sm:$0xf]
    %v1095 = vld [vmem:[#allocation2 + $0x1f8] sm:$0xf]
    %v1096 = vld [vmem:[%s2 + $0x5] ss:$0 sm:$0xff]
    %v1097 = vpack.c.bf16 %v1073, %v1072
    %v1098 = vpack.c.bf16 %v1075, %v1074
    %v1099 = vpack.c.bf16 %v1077, %v1076
    %v1100 = vpack.c.bf16 %v1079, %v1078
    %v1101 = vpack.c.bf16 %v1081, %v1080
    %v1102 = vpack.c.bf16 %v1083, %v1082
    %v1103 = vpack.c.bf16 %v1085, %v1084
    %v1104 = vpack.c.bf16 %v1087, %v1086
    %v1113 = vunpack.c.l.b16 %v1088
    %v1114 = vunpack.c.l.b16 %v1089
    %v1115 = vunpack.c.l.b16 %v1090
    %v1116 = vunpack.c.l.b16 %v1091
    %v1117 = vunpack.c.l.b16 %v1092
    %v1118 = vunpack.c.l.b16 %v1093
    %v1119 = vunpack.c.l.b16 %v1094
    %v1120 = vunpack.c.l.b16 %v1095
    %v1121 = vpack.c.b16 %v1114, %v1113
    %v1122 = vpack.c.b16 %v1116, %v1115
    %v1123 = vpack.c.b16 %v1118, %v1117
    %v1124 = vpack.c.b16 %v1120, %v1119
    %v1130 = vsel %vm114, %v1097, 0
    %v1133 = vsel %vm114, %v1098, 0
    %v1136 = vsel %vm114, %v1099, 0
    %v1139 = vsel %vm114, %v1100, 0
    %v1142 = vsel %vm114, %v1101, 0
    %v1145 = vsel %vm114, %v1102, 0
    %v1148 = vsel %vm114, %v1103, 0
    %v1151 = vsel %vm114, %v1104, 0
    %1153 = vmatprep.subr.bf16.mxu0 0
    %1154 = vmatpush1.bf16.msra.mxu0 0
    %1155 = vmatprep.subr.bf16.mxu0 0
    %1156 = vmatpush1.bf16.msra.mxu0 0
    %1157 = vmatprep.subr.bf16.mxu0 0
    %1158 = vmatpush1.bf16.msra.mxu0 0
    %1159 = vmatprep.subr.bf16.mxu0 0
    %1160 = vmatpush1.bf16.msra.mxu0 0
    %1161 = vmatprep.subr.bf16.mxu0 0
    %1162 = vmatpush1.bf16.msra.mxu0 %v1124
    %1163 = vmatprep.subr.bf16.mxu0 0
    %1164 = vmatpush1.bf16.msra.mxu0 %v1123
    %1165 = vmatprep.subr.bf16.mxu0 0
    %1166 = vmatpush1.bf16.msra.mxu0 %v1122
    %1167 = vmatprep.subr.bf16.mxu0 0
    %1168 = vmatpush1.bf16.msra.mxu0 %v1121
    %1169 = vmatprep.subr.bf16.mxu0 0
    %1170 = vmatpush2.bf16.msra.mxu0 0
    %1171 = vmatprep.subr.bf16.mxu0 0
    %1172 = vmatpush2.bf16.msra.mxu0 0
    %1173 = vmatprep.subr.bf16.mxu0 0
    %1174 = vmatpush2.bf16.msra.mxu0 0
    %1175 = vmatprep.subr.bf16.mxu0 0
    %1176 = vmatpush2.bf16.msra.mxu0 0
    %1177 = vmatprep.subr.bf16.mxu0 0
    %1178 = vmatpush2.bf16.msra.mxu0 0
    %1179 = vmatprep.subr.bf16.mxu0 0
    %1180 = vmatpush2.bf16.msra.mxu0 0
    %1181 = vmatprep.subr.bf16.mxu0 0
    %1182 = vmatpush2.bf16.msra.mxu0 0
    %1183 = vmatprep.subr.bf16.mxu0 0
    %1184 = vmatpush2.bf16.msra.mxu0 0
    %1185 = vmatprep.mubr.bf16.mxu0 0
    %1186 = vmatmul.mubr.bf16.gmra.mxu0 %v1130
    %v1187 = vpop.f32.mrf.mxu0
    %v1188 = vadd.f32 %v1096, %v1187
    %v1189 = vpop.f32.mrf.mxu0
    %v1190 = vpop.f32.mrf.mxu0
    %v1191 = vadd.f32 %v1096, %v1190
    %v1192 = vpop.f32.mrf.mxu0
    %1193 = vmatprep.mubr.bf16.mxu0 0
    %1194 = vmatmul.mubr.bf16.gmra.mxu0 %v1133
    %v1195 = vpop.f32.mrf.mxu0
    %v1196 = vadd.f32 %v1096, %v1195
    %v1197 = vpop.f32.mrf.mxu0
    %v1198 = vpop.f32.mrf.mxu0
    %v1199 = vadd.f32 %v1096, %v1198
    %v1200 = vpop.f32.mrf.mxu0
    %1201 = vmatprep.mubr.bf16.mxu0 0
    %1202 = vmatmul.mubr.bf16.gmra.mxu0 %v1136
    %v1203 = vpop.f32.mrf.mxu0
    %v1204 = vadd.f32 %v1096, %v1203
    %v1205 = vpop.f32.mrf.mxu0
    %v1206 = vpop.f32.mrf.mxu0
    %v1207 = vadd.f32 %v1096, %v1206
    %v1208 = vpop.f32.mrf.mxu0
    %1209 = vmatprep.mubr.bf16.mxu0 0
    %1210 = vmatmul.mubr.bf16.gmra.mxu0 %v1139
    %v1211 = vpop.f32.mrf.mxu0
    %v1212 = vadd.f32 %v1096, %v1211
    %v1213 = vpop.f32.mrf.mxu0
    %v1214 = vpop.f32.mrf.mxu0
    %v1215 = vadd.f32 %v1096, %v1214
    %v1216 = vpop.f32.mrf.mxu0
    %1217 = vmatprep.mubr.bf16.mxu0 0
    %1218 = vmatmul.mubr.bf16.gmra.mxu0 %v1142
    %v1219 = vpop.f32.mrf.mxu0
    %v1220 = vadd.f32 %v1096, %v1219
    %v1221 = vpop.f32.mrf.mxu0
    %v1222 = vpop.f32.mrf.mxu0
    %v1223 = vadd.f32 %v1096, %v1222
    %v1224 = vpop.f32.mrf.mxu0
    %1225 = vmatprep.mubr.bf16.mxu0 0
    %1226 = vmatmul.mubr.bf16.gmra.mxu0 %v1145
    %v1227 = vpop.f32.mrf.mxu0
    %v1228 = vadd.f32 %v1096, %v1227
    %v1229 = vpop.f32.mrf.mxu0
    %v1230 = vpop.f32.mrf.mxu0
    %v1231 = vadd.f32 %v1096, %v1230
    %v1232 = vpop.f32.mrf.mxu0
    %1233 = vmatprep.mubr.bf16.mxu0 0
    %1234 = vmatmul.mubr.bf16.gmra.mxu0 %v1148
    %v1235 = vpop.f32.mrf.mxu0
    %v1236 = vadd.f32 %v1096, %v1235
    %v1237 = vpop.f32.mrf.mxu0
    %v1238 = vpop.f32.mrf.mxu0
    %v1239 = vadd.f32 %v1096, %v1238
    %v1240 = vpop.f32.mrf.mxu0
    %1241 = vmatprep.mubr.bf16.mxu0 0
    %1242 = vmatmul.mubr.bf16.gmra.mxu0 %v1151
    %v1243 = vpop.f32.mrf.mxu0
    %v1244 = vadd.f32 %v1096, %v1243
    %v1245 = vpop.f32.mrf.mxu0
    %v1246 = vpop.f32.mrf.mxu0
    %v1247 = vadd.f32 %v1096, %v1246
    %v1248 = vpop.f32.mrf.mxu0
    %1249 = vdwg.mxu0
    %v1250 = vadd.f32 %v1188, %v894
    %v1251 = vadd.f32 %v1191, %v895
    %v1252 = vadd.f32 %v1196, %v896
    %v1253 = vadd.f32 %v1199, %v897
    %v1254 = vadd.f32 %v1204, %v898
    %v1255 = vadd.f32 %v1207, %v899
    %v1256 = vadd.f32 %v1212, %v900
    %v1257 = vadd.f32 %v1215, %v901
    %v1258 = vadd.f32 %v1220, %v902
    %v1259 = vadd.f32 %v1223, %v903
    %v1260 = vadd.f32 %v1228, %v904
    %v1261 = vadd.f32 %v1231, %v905
    %v1262 = vadd.f32 %v1236, %v906
    %v1263 = vadd.f32 %v1239, %v907
    %v1264 = vadd.f32 %v1244, %v908
    %v1265 = vadd.f32 %v1247, %v909
    %v1266 = vmax.f32 %v1250, 0.0
    %v1267 = vmax.f32 %v1251, 0.0
    %v1268 = vmax.f32 %v1252, 0.0
    %v1269 = vmax.f32 %v1253, 0.0
    %v1270 = vmax.f32 %v1254, 0.0
    %v1271 = vmax.f32 %v1255, 0.0
    %v1272 = vmax.f32 %v1256, 0.0
    %v1273 = vmax.f32 %v1257, 0.0
    %v1274 = vmax.f32 %v1258, 0.0
    %v1275 = vmax.f32 %v1259, 0.0
    %v1276 = vmax.f32 %v1260, 0.0
    %v1277 = vmax.f32 %v1261, 0.0
    %v1278 = vmax.f32 %v1262, 0.0
    %v1279 = vmax.f32 %v1263, 0.0
    %v1280 = vmax.f32 %v1264, 0.0
    %v1281 = vmax.f32 %v1265, 0.0
    %v1282 = vld [vmem:[#allocation2 + $0x200] sm:$0xff]
    %v1283 = vld [vmem:[#allocation2 + $0x208] sm:$0xff]
    %v1284 = vld [vmem:[#allocation2 + $0x210] sm:$0xff]
    %v1285 = vld [vmem:[#allocation2 + $0x218] sm:$0xff]
    %v1286 = vld [vmem:[#allocation2 + $0x220] sm:$0xff]
    %v1287 = vld [vmem:[#allocation2 + $0x228] sm:$0xff]
    %v1288 = vld [vmem:[#allocation2 + $0x230] sm:$0xff]
    %v1289 = vld [vmem:[#allocation2 + $0x238] sm:$0xff]
    %s1290 = scalar_lea.vmem %s2, 6
    %v1291 = vld [vmem:[%s1290] ss:$8 sm:$0x3]
    %v1292 = vpack.c.bf16 %v1267, %v1266
    %v1293 = vpack.c.bf16 %v1269, %v1268
    %v1294 = vpack.c.bf16 %v1271, %v1270
    %v1295 = vpack.c.bf16 %v1273, %v1272
    %v1296 = vpack.c.bf16 %v1275, %v1274
    %v1297 = vpack.c.bf16 %v1277, %v1276
    %v1298 = vpack.c.bf16 %v1279, %v1278
    %v1299 = vpack.c.bf16 %v1281, %v1280
    %v1301 = vlaneseq
    %v1302 = vshrl.u32 %v1301, 7
    %v1303 = vsub.s32 0, %v1302
    %v1304 = vrot.slane %v1291, %v1303
    %v1305 = vlaneseq
    %v1306 = vshrl.u32 %v1305, 7
    %v1307 = vsub.s32 1, %v1306
    %v1308 = vrot.slane %v1291, %v1307
    %v1319 = vunpack.c.l.b16 %v1282
    %v1320 = vunpack.c.h.b16 %v1282
    %v1321 = vunpack.c.l.b16 %v1283
    %v1322 = vunpack.c.h.b16 %v1283
    %v1323 = vunpack.c.l.b16 %v1284
    %v1324 = vunpack.c.h.b16 %v1284
    %v1325 = vunpack.c.l.b16 %v1285
    %v1326 = vunpack.c.h.b16 %v1285
    %v1327 = vunpack.c.l.b16 %v1286
    %v1328 = vunpack.c.h.b16 %v1286
    %v1329 = vunpack.c.l.b16 %v1287
    %v1330 = vunpack.c.h.b16 %v1287
    %v1331 = vunpack.c.l.b16 %v1288
    %v1332 = vunpack.c.h.b16 %v1288
    %v1333 = vunpack.c.l.b16 %v1289
    %v1334 = vunpack.c.h.b16 %v1289
    %v1335 = vpack.c.b16 %v1321, %v1319
    %v1336 = vpack.c.b16 %v1322, %v1320
    %v1337 = vpack.c.b16 %v1325, %v1323
    %v1338 = vpack.c.b16 %v1326, %v1324
    %v1339 = vpack.c.b16 %v1329, %v1327
    %v1340 = vpack.c.b16 %v1330, %v1328
    %v1341 = vpack.c.b16 %v1333, %v1331
    %v1342 = vpack.c.b16 %v1334, %v1332
    %v1352 = vsel %vm114, %v1292, 0
    %v1355 = vsel %vm114, %v1293, 0
    %v1358 = vsel %vm114, %v1294, 0
    %v1361 = vsel %vm114, %v1295, 0
    %v1364 = vsel %vm114, %v1296, 0
    %v1367 = vsel %vm114, %v1297, 0
    %v1370 = vsel %vm114, %v1298, 0
    %v1373 = vsel %vm114, %v1299, 0
    %1375 = vmatprep.subr.bf16.mxu0 0
    %1376 = vmatpush1.bf16.msra.mxu0 0
    %1377 = vmatprep.subr.bf16.mxu0 0
    %1378 = vmatpush1.bf16.msra.mxu0 0
    %1379 = vmatprep.subr.bf16.mxu0 0
    %1380 = vmatpush1.bf16.msra.mxu0 0
    %1381 = vmatprep.subr.bf16.mxu0 0
    %1382 = vmatpush1.bf16.msra.mxu0 0
    %1383 = vmatprep.subr.bf16.mxu0 %v1342
    %1384 = vmatpush1.bf16.msra.mxu0 %v1341
    %1385 = vmatprep.subr.bf16.mxu0 %v1340
    %1386 = vmatpush1.bf16.msra.mxu0 %v1339
    %1387 = vmatprep.subr.bf16.mxu0 %v1338
    %1388 = vmatpush1.bf16.msra.mxu0 %v1337
    %1389 = vmatprep.subr.bf16.mxu0 %v1336
    %1390 = vmatpush1.bf16.msra.mxu0 %v1335
    %1391 = vmatprep.subr.bf16.mxu0 0
    %1392 = vmatpush2.bf16.msra.mxu0 0
    %1393 = vmatprep.subr.bf16.mxu0 0
    %1394 = vmatpush2.bf16.msra.mxu0 0
    %1395 = vmatprep.subr.bf16.mxu0 0
    %1396 = vmatpush2.bf16.msra.mxu0 0
    %1397 = vmatprep.subr.bf16.mxu0 0
    %1398 = vmatpush2.bf16.msra.mxu0 0
    %1399 = vmatprep.subr.bf16.mxu0 0
    %1400 = vmatpush2.bf16.msra.mxu0 0
    %1401 = vmatprep.subr.bf16.mxu0 0
    %1402 = vmatpush2.bf16.msra.mxu0 0
    %1403 = vmatprep.subr.bf16.mxu0 0
    %1404 = vmatpush2.bf16.msra.mxu0 0
    %1405 = vmatprep.subr.bf16.mxu0 0
    %1406 = vmatpush2.bf16.msra.mxu0 0
    %1407 = vmatprep.mubr.bf16.mxu0 0
    %1408 = vmatmul.mubr.bf16.gmra.mxu0 %v1352
    %v1409 = vpop.f32.mrf.mxu0
    %v1410 = vadd.f32 %v1304, %v1409
    %v1411 = vpop.f32.mrf.mxu0
    %v1412 = vadd.f32 %v1308, %v1411
    %v1413 = vpop.f32.mrf.mxu0
    %v1414 = vadd.f32 %v1304, %v1413
    %v1415 = vpop.f32.mrf.mxu0
    %v1416 = vadd.f32 %v1308, %v1415
    %1417 = vmatprep.mubr.bf16.mxu0 0
    %1418 = vmatmul.mubr.bf16.gmra.mxu0 %v1355
    %v1419 = vpop.f32.mrf.mxu0
    %v1420 = vadd.f32 %v1304, %v1419
    %v1421 = vpop.f32.mrf.mxu0
    %v1422 = vadd.f32 %v1308, %v1421
    %v1423 = vpop.f32.mrf.mxu0
    %v1424 = vadd.f32 %v1304, %v1423
    %v1425 = vpop.f32.mrf.mxu0
    %v1426 = vadd.f32 %v1308, %v1425
    %1427 = vmatprep.mubr.bf16.mxu0 0
    %1428 = vmatmul.mubr.bf16.gmra.mxu0 %v1358
    %v1429 = vpop.f32.mrf.mxu0
    %v1430 = vadd.f32 %v1304, %v1429
    %v1431 = vpop.f32.mrf.mxu0
    %v1432 = vadd.f32 %v1308, %v1431
    %v1433 = vpop.f32.mrf.mxu0
    %v1434 = vadd.f32 %v1304, %v1433
    %v1435 = vpop.f32.mrf.mxu0
    %v1436 = vadd.f32 %v1308, %v1435
    %1437 = vmatprep.mubr.bf16.mxu0 0
    %1438 = vmatmul.mubr.bf16.gmra.mxu0 %v1361
    %v1439 = vpop.f32.mrf.mxu0
    %v1440 = vadd.f32 %v1304, %v1439
    %v1441 = vpop.f32.mrf.mxu0
    %v1442 = vadd.f32 %v1308, %v1441
    %v1443 = vpop.f32.mrf.mxu0
    %v1444 = vadd.f32 %v1304, %v1443
    %v1445 = vpop.f32.mrf.mxu0
    %v1446 = vadd.f32 %v1308, %v1445
    %1447 = vmatprep.mubr.bf16.mxu0 0
    %1448 = vmatmul.mubr.bf16.gmra.mxu0 %v1364
    %v1449 = vpop.f32.mrf.mxu0
    %v1450 = vadd.f32 %v1304, %v1449
    %v1451 = vpop.f32.mrf.mxu0
    %v1452 = vadd.f32 %v1308, %v1451
    %v1453 = vpop.f32.mrf.mxu0
    %v1454 = vadd.f32 %v1304, %v1453
    %v1455 = vpop.f32.mrf.mxu0
    %v1456 = vadd.f32 %v1308, %v1455
    %1457 = vmatprep.mubr.bf16.mxu0 0
    %1458 = vmatmul.mubr.bf16.gmra.mxu0 %v1367
    %v1459 = vpop.f32.mrf.mxu0
    %v1460 = vadd.f32 %v1304, %v1459
    %v1461 = vpop.f32.mrf.mxu0
    %v1462 = vadd.f32 %v1308, %v1461
    %v1463 = vpop.f32.mrf.mxu0
    %v1464 = vadd.f32 %v1304, %v1463
    %v1465 = vpop.f32.mrf.mxu0
    %v1466 = vadd.f32 %v1308, %v1465
    %1467 = vmatprep.mubr.bf16.mxu0 0
    %1468 = vmatmul.mubr.bf16.gmra.mxu0 %v1370
    %v1469 = vpop.f32.mrf.mxu0
    %v1470 = vadd.f32 %v1304, %v1469
    %v1471 = vpop.f32.mrf.mxu0
    %v1472 = vadd.f32 %v1308, %v1471
    %v1473 = vpop.f32.mrf.mxu0
    %v1474 = vadd.f32 %v1304, %v1473
    %v1475 = vpop.f32.mrf.mxu0
    %v1476 = vadd.f32 %v1308, %v1475
    %1477 = vmatprep.mubr.bf16.mxu0 0
    %1478 = vmatmul.mubr.bf16.gmra.mxu0 %v1373
    %v1479 = vpop.f32.mrf.mxu0
    %v1480 = vadd.f32 %v1304, %v1479
    %v1481 = vpop.f32.mrf.mxu0
    %v1482 = vadd.f32 %v1308, %v1481
    %v1483 = vpop.f32.mrf.mxu0
    %v1484 = vadd.f32 %v1304, %v1483
    %v1485 = vpop.f32.mrf.mxu0
    %v1486 = vadd.f32 %v1308, %v1485
    %1487 = vdwg.mxu0
    %v1488 = vmax.f32 %v1410, 0.0
    %v1489 = vmax.f32 %v1414, 0.0
    %v1490 = vmax.f32 %v1420, 0.0
    %v1491 = vmax.f32 %v1424, 0.0
    %v1492 = vmax.f32 %v1430, 0.0
    %v1493 = vmax.f32 %v1434, 0.0
    %v1494 = vmax.f32 %v1440, 0.0
    %v1495 = vmax.f32 %v1444, 0.0
    %v1496 = vmax.f32 %v1450, 0.0
    %v1497 = vmax.f32 %v1454, 0.0
    %v1498 = vmax.f32 %v1460, 0.0
    %v1499 = vmax.f32 %v1464, 0.0
    %v1500 = vmax.f32 %v1470, 0.0
    %v1501 = vmax.f32 %v1474, 0.0
    %v1502 = vmax.f32 %v1480, 0.0
    %v1503 = vmax.f32 %v1484, 0.0
    %v1504 = vld [vmem:[#allocation2 + $0x240] sm:$0xf]
    %v1505 = vld [vmem:[#allocation2 + $0x248] sm:$0xf]
    %v1506 = vld [vmem:[#allocation2 + $0x250] sm:$0xf]
    %v1507 = vld [vmem:[#allocation2 + $0x258] sm:$0xf]
    %v1508 = vld [vmem:[%s2 + $0x7] ss:$0 sm:$0xff]
    %v1509 = vpack.c.bf16 %v1489, %v1488
    %v1510 = vpack.c.bf16 %v1491, %v1490
    %v1511 = vpack.c.bf16 %v1493, %v1492
    %v1512 = vpack.c.bf16 %v1495, %v1494
    %v1513 = vpack.c.bf16 %v1497, %v1496
    %v1514 = vpack.c.bf16 %v1499, %v1498
    %v1515 = vpack.c.bf16 %v1501, %v1500
    %v1516 = vpack.c.bf16 %v1503, %v1502
    %v1521 = vunpack.c.l.b16 %v1504
    %v1522 = vunpack.c.l.b16 %v1505
    %v1523 = vunpack.c.l.b16 %v1506
    %v1524 = vunpack.c.l.b16 %v1507
    %v1525 = vpack.c.b16 %v1522, %v1521
    %v1526 = vpack.c.b16 %v1524, %v1523
    %vm1529 = vcmask 261120
    %v1531 = vsel %vm1529, %v1509, 0
    %v1534 = vsel %vm1529, %v1510, 0
    %v1537 = vsel %vm1529, %v1511, 0
    %v1540 = vsel %vm1529, %v1512, 0
    %v1543 = vsel %vm1529, %v1513, 0
    %v1546 = vsel %vm1529, %v1514, 0
    %v1549 = vsel %vm1529, %v1515, 0
    %v1552 = vsel %vm1529, %v1516, 0
    %1554 = vmatprep.subr.bf16.mxu0 0
    %1555 = vmatpush1.bf16.msra.mxu0 0
    %1556 = vmatprep.subr.bf16.mxu0 0
    %1557 = vmatpush1.bf16.msra.mxu0 0
    %1558 = vmatprep.subr.bf16.mxu0 0
    %1559 = vmatpush1.bf16.msra.mxu0 0
    %1560 = vmatprep.subr.bf16.mxu0 0
    %1561 = vmatpush1.bf16.msra.mxu0 0
    %1562 = vmatprep.subr.bf16.mxu0 0
    %1563 = vmatpush1.bf16.msra.mxu0 0
    %1564 = vmatprep.subr.bf16.mxu0 0
    %1565 = vmatpush1.bf16.msra.mxu0 0
    %1566 = vmatprep.subr.bf16.mxu0 0
    %1567 = vmatpush1.bf16.msra.mxu0 %v1526
    %1568 = vmatprep.subr.bf16.mxu0 0
    %1569 = vmatpush1.bf16.msra.mxu0 %v1525
    %1570 = vmatprep.subr.bf16.mxu0 0
    %1571 = vmatpush2.bf16.msra.mxu0 0
    %1572 = vmatprep.subr.bf16.mxu0 0
    %1573 = vmatpush2.bf16.msra.mxu0 0
    %1574 = vmatprep.subr.bf16.mxu0 0
    %1575 = vmatpush2.bf16.msra.mxu0 0
    %1576 = vmatprep.subr.bf16.mxu0 0
    %1577 = vmatpush2.bf16.msra.mxu0 0
    %1578 = vmatprep.subr.bf16.mxu0 0
    %1579 = vmatpush2.bf16.msra.mxu0 0
    %1580 = vmatprep.subr.bf16.mxu0 0
    %1581 = vmatpush2.bf16.msra.mxu0 0
    %1582 = vmatprep.subr.bf16.mxu0 0
    %1583 = vmatpush2.bf16.msra.mxu0 0
    %1584 = vmatprep.subr.bf16.mxu0 0
    %1585 = vmatpush2.bf16.msra.mxu0 0
    %1586 = vmatprep.mubr.bf16.mxu0 0
    %1587 = vmatmul.mubr.bf16.gmra.mxu0 %v1531
    %v1588 = vpop.f32.mrf.mxu0
    %v1589 = vadd.f32 %v1508, %v1588
    %v1590 = vpop.f32.mrf.mxu0
    %v1591 = vpop.f32.mrf.mxu0
    %v1592 = vadd.f32 %v1508, %v1591
    %v1593 = vpop.f32.mrf.mxu0
    %1594 = vmatprep.mubr.bf16.mxu0 0
    %1595 = vmatmul.mubr.bf16.gmra.mxu0 %v1534
    %v1596 = vpop.f32.mrf.mxu0
    %v1597 = vadd.f32 %v1508, %v1596
    %v1598 = vpop.f32.mrf.mxu0
    %v1599 = vpop.f32.mrf.mxu0
    %v1600 = vadd.f32 %v1508, %v1599
    %v1601 = vpop.f32.mrf.mxu0
    %1602 = vmatprep.mubr.bf16.mxu0 0
    %1603 = vmatmul.mubr.bf16.gmra.mxu0 %v1537
    %v1604 = vpop.f32.mrf.mxu0
    %v1605 = vadd.f32 %v1508, %v1604
    %v1606 = vpop.f32.mrf.mxu0
    %v1607 = vpop.f32.mrf.mxu0
    %v1608 = vadd.f32 %v1508, %v1607
    %v1609 = vpop.f32.mrf.mxu0
    %1610 = vmatprep.mubr.bf16.mxu0 0
    %1611 = vmatmul.mubr.bf16.gmra.mxu0 %v1540
    %v1612 = vpop.f32.mrf.mxu0
    %v1613 = vadd.f32 %v1508, %v1612
    %v1614 = vpop.f32.mrf.mxu0
    %v1615 = vpop.f32.mrf.mxu0
    %v1616 = vadd.f32 %v1508, %v1615
    %v1617 = vpop.f32.mrf.mxu0
    %1618 = vmatprep.mubr.bf16.mxu0 0
    %1619 = vmatmul.mubr.bf16.gmra.mxu0 %v1543
    %v1620 = vpop.f32.mrf.mxu0
    %v1621 = vadd.f32 %v1508, %v1620
    %v1622 = vpop.f32.mrf.mxu0
    %v1623 = vpop.f32.mrf.mxu0
    %v1624 = vadd.f32 %v1508, %v1623
    %v1625 = vpop.f32.mrf.mxu0
    %1626 = vmatprep.mubr.bf16.mxu0 0
    %1627 = vmatmul.mubr.bf16.gmra.mxu0 %v1546
    %v1628 = vpop.f32.mrf.mxu0
    %v1629 = vadd.f32 %v1508, %v1628
    %v1630 = vpop.f32.mrf.mxu0
    %v1631 = vpop.f32.mrf.mxu0
    %v1632 = vadd.f32 %v1508, %v1631
    %v1633 = vpop.f32.mrf.mxu0
    %1634 = vmatprep.mubr.bf16.mxu0 0
    %1635 = vmatmul.mubr.bf16.gmra.mxu0 %v1549
    %v1636 = vpop.f32.mrf.mxu0
    %v1637 = vadd.f32 %v1508, %v1636
    %v1638 = vpop.f32.mrf.mxu0
    %v1639 = vpop.f32.mrf.mxu0
    %v1640 = vadd.f32 %v1508, %v1639
    %v1641 = vpop.f32.mrf.mxu0
    %1642 = vmatprep.mubr.bf16.mxu0 0
    %1643 = vmatmul.mubr.bf16.gmra.mxu0 %v1552
    %v1644 = vpop.f32.mrf.mxu0
    %v1645 = vadd.f32 %v1508, %v1644
    %v1646 = vpop.f32.mrf.mxu0
    %v1647 = vpop.f32.mrf.mxu0
    %v1648 = vadd.f32 %v1508, %v1647
    %v1649 = vpop.f32.mrf.mxu0
    %1650 = vdwg.mxu0
    %v1651 = vadd.f32 %v1589, %v1412
    %v1652 = vadd.f32 %v1592, %v1416
    %v1653 = vadd.f32 %v1597, %v1422
    %v1654 = vadd.f32 %v1600, %v1426
    %v1655 = vadd.f32 %v1605, %v1432
    %v1656 = vadd.f32 %v1608, %v1436
    %v1657 = vadd.f32 %v1613, %v1442
    %v1658 = vadd.f32 %v1616, %v1446
    %v1659 = vadd.f32 %v1621, %v1452
    %v1660 = vadd.f32 %v1624, %v1456
    %v1661 = vadd.f32 %v1629, %v1462
    %v1662 = vadd.f32 %v1632, %v1466
    %v1663 = vadd.f32 %v1637, %v1472
    %v1664 = vadd.f32 %v1640, %v1476
    %v1665 = vadd.f32 %v1645, %v1482
    %v1666 = vadd.f32 %v1648, %v1486
    %v1667 = vmax.f32 %v1651, 0.0
    %v1668 = vmax.f32 %v1652, 0.0
    %v1669 = vmax.f32 %v1653, 0.0
    %v1670 = vmax.f32 %v1654, 0.0
    %v1671 = vmax.f32 %v1655, 0.0
    %v1672 = vmax.f32 %v1656, 0.0
    %v1673 = vmax.f32 %v1657, 0.0
    %v1674 = vmax.f32 %v1658, 0.0
    %v1675 = vmax.f32 %v1659, 0.0
    %v1676 = vmax.f32 %v1660, 0.0
    %v1677 = vmax.f32 %v1661, 0.0
    %v1678 = vmax.f32 %v1662, 0.0
    %v1679 = vmax.f32 %v1663, 0.0
    %v1680 = vmax.f32 %v1664, 0.0
    %v1681 = vmax.f32 %v1665, 0.0
    %v1682 = vmax.f32 %v1666, 0.0
    %v1683 = vld [vmem:[#allocation2 + $0x260] sm:$0xf]
    %v1684 = vld [vmem:[#allocation2 + $0x268] sm:$0xf]
    %v1685 = vld [vmem:[#allocation2 + $0x270] sm:$0xf]
    %v1686 = vld [vmem:[#allocation2 + $0x278] sm:$0xf]
    %v1687 = vld [vmem:[%s2 + $0x10] ss:$0 sm:$0xff]
    %v1688 = vpack.c.bf16 %v1668, %v1667
    %v1689 = vpack.c.bf16 %v1670, %v1669
    %v1690 = vpack.c.bf16 %v1672, %v1671
    %v1691 = vpack.c.bf16 %v1674, %v1673
    %v1692 = vpack.c.bf16 %v1676, %v1675
    %v1693 = vpack.c.bf16 %v1678, %v1677
    %v1694 = vpack.c.bf16 %v1680, %v1679
    %v1695 = vpack.c.bf16 %v1682, %v1681
    %v1700 = vunpack.c.l.b16 %v1683
    %v1701 = vunpack.c.l.b16 %v1684
    %v1702 = vunpack.c.l.b16 %v1685
    %v1703 = vunpack.c.l.b16 %v1686
    %v1704 = vpack.c.b16 %v1701, %v1700
    %v1705 = vpack.c.b16 %v1703, %v1702
    %v1709 = vsel %vm1529, %v1688, 0
    %v1712 = vsel %vm1529, %v1689, 0
    %v1715 = vsel %vm1529, %v1690, 0
    %v1718 = vsel %vm1529, %v1691, 0
    %v1721 = vsel %vm1529, %v1692, 0
    %v1724 = vsel %vm1529, %v1693, 0
    %v1727 = vsel %vm1529, %v1694, 0
    %v1730 = vsel %vm1529, %v1695, 0
    %1732 = vmatprep.subr.bf16.mxu0 0
    %1733 = vmatpush1.bf16.msra.mxu0 0
    %1734 = vmatprep.subr.bf16.mxu0 0
    %1735 = vmatpush1.bf16.msra.mxu0 0
    %1736 = vmatprep.subr.bf16.mxu0 0
    %1737 = vmatpush1.bf16.msra.mxu0 0
    %1738 = vmatprep.subr.bf16.mxu0 0
    %1739 = vmatpush1.bf16.msra.mxu0 0
    %1740 = vmatprep.subr.bf16.mxu0 0
    %1741 = vmatpush1.bf16.msra.mxu0 0
    %1742 = vmatprep.subr.bf16.mxu0 0
    %1743 = vmatpush1.bf16.msra.mxu0 0
    %1744 = vmatprep.subr.bf16.mxu0 0
    %1745 = vmatpush1.bf16.msra.mxu0 %v1705
    %1746 = vmatprep.subr.bf16.mxu0 0
    %1747 = vmatpush1.bf16.msra.mxu0 %v1704
    %1748 = vmatprep.subr.bf16.mxu0 0
    %1749 = vmatpush2.bf16.msra.mxu0 0
    %1750 = vmatprep.subr.bf16.mxu0 0
    %1751 = vmatpush2.bf16.msra.mxu0 0
    %1752 = vmatprep.subr.bf16.mxu0 0
    %1753 = vmatpush2.bf16.msra.mxu0 0
    %1754 = vmatprep.subr.bf16.mxu0 0
    %1755 = vmatpush2.bf16.msra.mxu0 0
    %1756 = vmatprep.subr.bf16.mxu0 0
    %1757 = vmatpush2.bf16.msra.mxu0 0
    %1758 = vmatprep.subr.bf16.mxu0 0
    %1759 = vmatpush2.bf16.msra.mxu0 0
    %1760 = vmatprep.subr.bf16.mxu0 0
    %1761 = vmatpush2.bf16.msra.mxu0 0
    %1762 = vmatprep.subr.bf16.mxu0 0
    %1763 = vmatpush2.bf16.msra.mxu0 0
    %1764 = vmatprep.mubr.bf16.mxu0 0
    %1765 = vmatmul.mubr.bf16.gmra.mxu0 %v1709
    %v1766 = vpop.f32.mrf.mxu0
    %v1767 = vadd.f32 %v1687, %v1766
    %v1768 = vpop.f32.mrf.mxu0
    %v1769 = vpop.f32.mrf.mxu0
    %v1770 = vadd.f32 %v1687, %v1769
    %v1771 = vpop.f32.mrf.mxu0
    %1772 = vmatprep.mubr.bf16.mxu0 0
    %1773 = vmatmul.mubr.bf16.gmra.mxu0 %v1712
    %v1774 = vpop.f32.mrf.mxu0
    %v1775 = vadd.f32 %v1687, %v1774
    %v1776 = vpop.f32.mrf.mxu0
    %v1777 = vpop.f32.mrf.mxu0
    %v1778 = vadd.f32 %v1687, %v1777
    %v1779 = vpop.f32.mrf.mxu0
    %1780 = vmatprep.mubr.bf16.mxu0 0
    %1781 = vmatmul.mubr.bf16.gmra.mxu0 %v1715
    %v1782 = vpop.f32.mrf.mxu0
    %v1783 = vadd.f32 %v1687, %v1782
    %v1784 = vpop.f32.mrf.mxu0
    %v1785 = vpop.f32.mrf.mxu0
    %v1786 = vadd.f32 %v1687, %v1785
    %v1787 = vpop.f32.mrf.mxu0
    %1788 = vmatprep.mubr.bf16.mxu0 0
    %1789 = vmatmul.mubr.bf16.gmra.mxu0 %v1718
    %v1790 = vpop.f32.mrf.mxu0
    %v1791 = vadd.f32 %v1687, %v1790
    %v1792 = vpop.f32.mrf.mxu0
    %v1793 = vpop.f32.mrf.mxu0
    %v1794 = vadd.f32 %v1687, %v1793
    %v1795 = vpop.f32.mrf.mxu0
    %1796 = vmatprep.mubr.bf16.mxu0 0
    %1797 = vmatmul.mubr.bf16.gmra.mxu0 %v1721
    %v1798 = vpop.f32.mrf.mxu0
    %v1799 = vadd.f32 %v1687, %v1798
    %v1800 = vpop.f32.mrf.mxu0
    %v1801 = vpop.f32.mrf.mxu0
    %v1802 = vadd.f32 %v1687, %v1801
    %v1803 = vpop.f32.mrf.mxu0
    %1804 = vmatprep.mubr.bf16.mxu0 0
    %1805 = vmatmul.mubr.bf16.gmra.mxu0 %v1724
    %v1806 = vpop.f32.mrf.mxu0
    %v1807 = vadd.f32 %v1687, %v1806
    %v1808 = vpop.f32.mrf.mxu0
    %v1809 = vpop.f32.mrf.mxu0
    %v1810 = vadd.f32 %v1687, %v1809
    %v1811 = vpop.f32.mrf.mxu0
    %1812 = vmatprep.mubr.bf16.mxu0 0
    %1813 = vmatmul.mubr.bf16.gmra.mxu0 %v1727
    %v1814 = vpop.f32.mrf.mxu0
    %v1815 = vadd.f32 %v1687, %v1814
    %v1816 = vpop.f32.mrf.mxu0
    %v1817 = vpop.f32.mrf.mxu0
    %v1818 = vadd.f32 %v1687, %v1817
    %v1819 = vpop.f32.mrf.mxu0
    %1820 = vmatprep.mubr.bf16.mxu0 0
    %1821 = vmatmul.mubr.bf16.gmra.mxu0 %v1730
    %v1822 = vpop.f32.mrf.mxu0
    %v1823 = vadd.f32 %v1687, %v1822
    %v1824 = vpop.f32.mrf.mxu0
    %v1825 = vpop.f32.mrf.mxu0
    %v1826 = vadd.f32 %v1687, %v1825
    %v1827 = vpop.f32.mrf.mxu0
    %1828 = vdwg.mxu0
    %v1829 = vmax.f32 %v1767, 0.0
    %v1830 = vmax.f32 %v1770, 0.0
    %v1831 = vmax.f32 %v1775, 0.0
    %v1832 = vmax.f32 %v1778, 0.0
    %v1833 = vmax.f32 %v1783, 0.0
    %v1834 = vmax.f32 %v1786, 0.0
    %v1835 = vmax.f32 %v1791, 0.0
    %v1836 = vmax.f32 %v1794, 0.0
    %v1837 = vmax.f32 %v1799, 0.0
    %v1838 = vmax.f32 %v1802, 0.0
    %v1839 = vmax.f32 %v1807, 0.0
    %v1840 = vmax.f32 %v1810, 0.0
    %v1841 = vmax.f32 %v1815, 0.0
    %v1842 = vmax.f32 %v1818, 0.0
    %v1843 = vmax.f32 %v1823, 0.0
    %v1844 = vmax.f32 %v1826, 0.0
    %v1845 = vld [vmem:[#allocation2 + $0x280] sm:$0xf]
    %v1846 = vld [vmem:[#allocation2 + $0x288] sm:$0xf]
    %v1847 = vld [vmem:[#allocation2 + $0x290] sm:$0xf]
    %v1848 = vld [vmem:[#allocation2 + $0x298] sm:$0xf]
    %v1849 = vld [vmem:[#allocation2 + $0x2a0] sm:$0xf]
    %v1850 = vld [vmem:[#allocation2 + $0x2a8] sm:$0xf]
    %v1851 = vld [vmem:[#allocation2 + $0x2b0] sm:$0xf]
    %v1852 = vld [vmem:[#allocation2 + $0x2b8] sm:$0xf]
    %v1853 = vld [vmem:[%s2 + $0x11] ss:$0 sm:$0xff]
    %v1854 = vpack.c.bf16 %v1830, %v1829
    %v1855 = vpack.c.bf16 %v1832, %v1831
    %v1856 = vpack.c.bf16 %v1834, %v1833
    %v1857 = vpack.c.bf16 %v1836, %v1835
    %v1858 = vpack.c.bf16 %v1838, %v1837
    %v1859 = vpack.c.bf16 %v1840, %v1839
    %v1860 = vpack.c.bf16 %v1842, %v1841
    %v1861 = vpack.c.bf16 %v1844, %v1843
    %v1870 = vunpack.c.l.b16 %v1845
    %v1871 = vunpack.c.l.b16 %v1846
    %v1872 = vunpack.c.l.b16 %v1847
    %v1873 = vunpack.c.l.b16 %v1848
    %v1874 = vunpack.c.l.b16 %v1849
    %v1875 = vunpack.c.l.b16 %v1850
    %v1876 = vunpack.c.l.b16 %v1851
    %v1877 = vunpack.c.l.b16 %v1852
    %v1878 = vpack.c.b16 %v1871, %v1870
    %v1879 = vpack.c.b16 %v1873, %v1872
    %v1880 = vpack.c.b16 %v1875, %v1874
    %v1881 = vpack.c.b16 %v1877, %v1876
    %v1887 = vsel %vm114, %v1854, 0
    %v1890 = vsel %vm114, %v1855, 0
    %v1893 = vsel %vm114, %v1856, 0
    %v1896 = vsel %vm114, %v1857, 0
    %v1899 = vsel %vm114, %v1858, 0
    %v1902 = vsel %vm114, %v1859, 0
    %v1905 = vsel %vm114, %v1860, 0
    %v1908 = vsel %vm114, %v1861, 0
    %1910 = vmatprep.subr.bf16.mxu0 0
    %1911 = vmatpush1.bf16.msra.mxu0 0
    %1912 = vmatprep.subr.bf16.mxu0 0
    %1913 = vmatpush1.bf16.msra.mxu0 0
    %1914 = vmatprep.subr.bf16.mxu0 0
    %1915 = vmatpush1.bf16.msra.mxu0 0
    %1916 = vmatprep.subr.bf16.mxu0 0
    %1917 = vmatpush1.bf16.msra.mxu0 0
    %1918 = vmatprep.subr.bf16.mxu0 0
    %1919 = vmatpush1.bf16.msra.mxu0 %v1881
    %1920 = vmatprep.subr.bf16.mxu0 0
    %1921 = vmatpush1.bf16.msra.mxu0 %v1880
    %1922 = vmatprep.subr.bf16.mxu0 0
    %1923 = vmatpush1.bf16.msra.mxu0 %v1879
    %1924 = vmatprep.subr.bf16.mxu0 0
    %1925 = vmatpush1.bf16.msra.mxu0 %v1878
    %1926 = vmatprep.subr.bf16.mxu0 0
    %1927 = vmatpush2.bf16.msra.mxu0 0
    %1928 = vmatprep.subr.bf16.mxu0 0
    %1929 = vmatpush2.bf16.msra.mxu0 0
    %1930 = vmatprep.subr.bf16.mxu0 0
    %1931 = vmatpush2.bf16.msra.mxu0 0
    %1932 = vmatprep.subr.bf16.mxu0 0
    %1933 = vmatpush2.bf16.msra.mxu0 0
    %1934 = vmatprep.subr.bf16.mxu0 0
    %1935 = vmatpush2.bf16.msra.mxu0 0
    %1936 = vmatprep.subr.bf16.mxu0 0
    %1937 = vmatpush2.bf16.msra.mxu0 0
    %1938 = vmatprep.subr.bf16.mxu0 0
    %1939 = vmatpush2.bf16.msra.mxu0 0
    %1940 = vmatprep.subr.bf16.mxu0 0
    %1941 = vmatpush2.bf16.msra.mxu0 0
    %1942 = vmatprep.mubr.bf16.mxu0 0
    %1943 = vmatmul.mubr.bf16.gmra.mxu0 %v1887
    %v1944 = vpop.f32.mrf.mxu0
    %v1945 = vadd.f32 %v1853, %v1944
    %v1946 = vpop.f32.mrf.mxu0
    %v1947 = vpop.f32.mrf.mxu0
    %v1948 = vadd.f32 %v1853, %v1947
    %v1949 = vpop.f32.mrf.mxu0
    %1950 = vmatprep.mubr.bf16.mxu0 0
    %1951 = vmatmul.mubr.bf16.gmra.mxu0 %v1890
    %v1952 = vpop.f32.mrf.mxu0
    %v1953 = vadd.f32 %v1853, %v1952
    %v1954 = vpop.f32.mrf.mxu0
    %v1955 = vpop.f32.mrf.mxu0
    %v1956 = vadd.f32 %v1853, %v1955
    %v1957 = vpop.f32.mrf.mxu0
    %1958 = vmatprep.mubr.bf16.mxu0 0
    %1959 = vmatmul.mubr.bf16.gmra.mxu0 %v1893
    %v1960 = vpop.f32.mrf.mxu0
    %v1961 = vadd.f32 %v1853, %v1960
    %v1962 = vpop.f32.mrf.mxu0
    %v1963 = vpop.f32.mrf.mxu0
    %v1964 = vadd.f32 %v1853, %v1963
    %v1965 = vpop.f32.mrf.mxu0
    %1966 = vmatprep.mubr.bf16.mxu0 0
    %1967 = vmatmul.mubr.bf16.gmra.mxu0 %v1896
    %v1968 = vpop.f32.mrf.mxu0
    %v1969 = vadd.f32 %v1853, %v1968
    %v1970 = vpop.f32.mrf.mxu0
    %v1971 = vpop.f32.mrf.mxu0
    %v1972 = vadd.f32 %v1853, %v1971
    %v1973 = vpop.f32.mrf.mxu0
    %1974 = vmatprep.mubr.bf16.mxu0 0
    %1975 = vmatmul.mubr.bf16.gmra.mxu0 %v1899
    %v1976 = vpop.f32.mrf.mxu0
    %v1977 = vadd.f32 %v1853, %v1976
    %v1978 = vpop.f32.mrf.mxu0
    %v1979 = vpop.f32.mrf.mxu0
    %v1980 = vadd.f32 %v1853, %v1979
    %v1981 = vpop.f32.mrf.mxu0
    %1982 = vmatprep.mubr.bf16.mxu0 0
    %1983 = vmatmul.mubr.bf16.gmra.mxu0 %v1902
    %v1984 = vpop.f32.mrf.mxu0
    %v1985 = vadd.f32 %v1853, %v1984
    %v1986 = vpop.f32.mrf.mxu0
    %v1987 = vpop.f32.mrf.mxu0
    %v1988 = vadd.f32 %v1853, %v1987
    %v1989 = vpop.f32.mrf.mxu0
    %1990 = vmatprep.mubr.bf16.mxu0 0
    %1991 = vmatmul.mubr.bf16.gmra.mxu0 %v1905
    %v1992 = vpop.f32.mrf.mxu0
    %v1993 = vadd.f32 %v1853, %v1992
    %v1994 = vpop.f32.mrf.mxu0
    %v1995 = vpop.f32.mrf.mxu0
    %v1996 = vadd.f32 %v1853, %v1995
    %v1997 = vpop.f32.mrf.mxu0
    %1998 = vmatprep.mubr.bf16.mxu0 0
    %1999 = vmatmul.mubr.bf16.gmra.mxu0 %v1908
    %v2000 = vpop.f32.mrf.mxu0
    %v2001 = vadd.f32 %v1853, %v2000
    %v2002 = vpop.f32.mrf.mxu0
    %v2003 = vpop.f32.mrf.mxu0
    %v2004 = vadd.f32 %v1853, %v2003
    %v2005 = vpop.f32.mrf.mxu0
    %2006 = vdwg.mxu0
    %vm2007 = vcmask 64512
    %v2008 = vsel %vm2007, %v1945, 0.0
    %v2009 = vsel %vm2007, %v1948, 0.0
    %v2010 = vadd.f32 %v2008, %v2009
    %v2011 = vsel %vm2007, %v1953, 0.0
    %v2012 = vadd.f32 %v2010, %v2011
    %v2013 = vsel %vm2007, %v1956, 0.0
    %v2014 = vadd.f32 %v2012, %v2013
    %v2015 = vsel %vm2007, %v1961, 0.0
    %v2016 = vadd.f32 %v2014, %v2015
    %v2017 = vsel %vm2007, %v1964, 0.0
    %v2018 = vadd.f32 %v2016, %v2017
    %v2019 = vsel %vm2007, %v1969, 0.0
    %v2020 = vadd.f32 %v2018, %v2019
    %v2021 = vsel %vm2007, %v1972, 0.0
    %v2022 = vadd.f32 %v2020, %v2021
    %v2023 = vsel %vm2007, %v1977, 0.0
    %v2024 = vadd.f32 %v2022, %v2023
    %v2025 = vsel %vm2007, %v1980, 0.0
    %v2026 = vadd.f32 %v2024, %v2025
    %v2027 = vsel %vm2007, %v1985, 0.0
    %v2028 = vadd.f32 %v2026, %v2027
    %v2029 = vsel %vm2007, %v1988, 0.0
    %v2030 = vadd.f32 %v2028, %v2029
    %v2031 = vsel %vm2007, %v1993, 0.0
    %v2032 = vadd.f32 %v2030, %v2031
    %v2033 = vsel %vm2007, %v1996, 0.0
    %v2034 = vadd.f32 %v2032, %v2033
    %v2035 = vsel %vm2007, %v2001, 0.0
    %v2036 = vadd.f32 %v2034, %v2035
    %v2037 = vsel %vm2007, %v2004, 0.0
    %v2038 = vadd.f32 %v2036, %v2037
    %2039 = vadd.xlane.f32.xlu0 %v2038
    %v2040 = vpop.xlane.xlu0 %2039
    %v2041 = vrot.slane %v2040, 4
    %v2042 = vadd.f32 %v2040, %v2041
    %v2043 = vrot.slane %v2042, 2
    %v2044 = vadd.f32 %v2042, %v2043
    %v2045 = vrot.slane %v2044, 1
    %v2046 = vadd.f32 %v2044, %v2045
    %s2047 = vtos %v2046
    %v2048 = vrcp.pop 1024.0
    %s2049 = vtos %v2048
    %s2050 = smul.f32 %s2047, %s2049
    %2052 = vset.pattern.permute.xlu0 120
    %2053 = vperm.xlu0 %2052, %v1945
    %v2054 = vpop.permute.xlu0 %2053
    %2057 = vset.pattern.permute.xlu0 120
    %2058 = vperm.xlu0 %2057, %v1948
    %v2059 = vpop.permute.xlu0 %2058
    %2062 = vset.pattern.permute.xlu0 120
    %2063 = vperm.xlu0 %2062, %v1953
    %v2064 = vpop.permute.xlu0 %2063
    %2067 = vset.pattern.permute.xlu0 120
    %2068 = vperm.xlu0 %2067, %v1956
    %v2069 = vpop.permute.xlu0 %2068
    %2072 = vset.pattern.permute.xlu0 120
    %2073 = vperm.xlu0 %2072, %v1961
    %v2074 = vpop.permute.xlu0 %2073
    %2077 = vset.pattern.permute.xlu0 120
    %2078 = vperm.xlu0 %2077, %v1964
    %v2079 = vpop.permute.xlu0 %2078
    %2082 = vset.pattern.permute.xlu0 120
    %2083 = vperm.xlu0 %2082, %v1969
    %v2084 = vpop.permute.xlu0 %2083
    %2087 = vset.pattern.permute.xlu0 120
    %2088 = vperm.xlu0 %2087, %v1972
    %v2089 = vpop.permute.xlu0 %2088
    %2092 = vset.pattern.permute.xlu0 120
    %2093 = vperm.xlu0 %2092, %v1977
    %v2094 = vpop.permute.xlu0 %2093
    %2097 = vset.pattern.permute.xlu0 120
    %2098 = vperm.xlu0 %2097, %v1980
    %v2099 = vpop.permute.xlu0 %2098
    %2102 = vset.pattern.permute.xlu0 120
    %2103 = vperm.xlu0 %2102, %v1985
    %v2104 = vpop.permute.xlu0 %2103
    %2107 = vset.pattern.permute.xlu0 120
    %2108 = vperm.xlu0 %2107, %v1988
    %v2109 = vpop.permute.xlu0 %2108
    %2112 = vset.pattern.permute.xlu0 120
    %2113 = vperm.xlu0 %2112, %v1993
    %v2114 = vpop.permute.xlu0 %2113
    %2117 = vset.pattern.permute.xlu0 120
    %2118 = vperm.xlu0 %2117, %v1996
    %v2119 = vpop.permute.xlu0 %2118
    %2122 = vset.pattern.permute.xlu0 120
    %2123 = vperm.xlu0 %2122, %v2001
    %v2124 = vpop.permute.xlu0 %2123
    %2127 = vset.pattern.permute.xlu0 120
    %2128 = vperm.xlu0 %2127, %v2004
    %v2129 = vpop.permute.xlu0 %2128
    %v2131 = vadd.f32 %v1945, %v2054
    %v2132 = vadd.f32 %v1948, %v2059
    %v2133 = vadd.f32 %v1953, %v2064
    %v2134 = vadd.f32 %v1956, %v2069
    %v2135 = vadd.f32 %v1961, %v2074
    %v2136 = vadd.f32 %v1964, %v2079
    %v2137 = vadd.f32 %v1969, %v2084
    %v2138 = vadd.f32 %v1972, %v2089
    %v2139 = vadd.f32 %v1977, %v2094
    %v2140 = vadd.f32 %v1980, %v2099
    %v2141 = vadd.f32 %v1985, %v2104
    %v2142 = vadd.f32 %v1988, %v2109
    %v2143 = vadd.f32 %v1993, %v2114
    %v2144 = vadd.f32 %v1996, %v2119
    %v2145 = vadd.f32 %v2001, %v2124
    %v2146 = vadd.f32 %v2004, %v2129
    %v2147 = vstv %s2050
    %v2148 = vsub.f32 %v2131, %v2147
    %v2149 = vsub.f32 %v2132, %v2147
    %v2150 = vsub.f32 %v2133, %v2147
    %v2151 = vsub.f32 %v2134, %v2147
    %v2152 = vsub.f32 %v2135, %v2147
    %v2153 = vsub.f32 %v2136, %v2147
    %v2154 = vsub.f32 %v2137, %v2147
    %v2155 = vsub.f32 %v2138, %v2147
    %v2156 = vsub.f32 %v2139, %v2147
    %v2157 = vsub.f32 %v2140, %v2147
    %v2158 = vsub.f32 %v2141, %v2147
    %v2159 = vsub.f32 %v2142, %v2147
    %v2160 = vsub.f32 %v2143, %v2147
    %v2161 = vsub.f32 %v2144, %v2147
    %v2162 = vsub.f32 %v2145, %v2147
    %v2163 = vsub.f32 %v2146, %v2147
    %2164 = vst [vmem:[#allocation5] sm:$0xff] %v2148
    %2165 = vst [vmem:[#allocation5 + $0x8] sm:$0xff] %v2149
    %2166 = vst [vmem:[#allocation5 + $0x10] sm:$0xff] %v2150
    %2167 = vst [vmem:[#allocation5 + $0x18] sm:$0xff] %v2151
    %2168 = vst [vmem:[#allocation5 + $0x20] sm:$0xff] %v2152
    %2169 = vst [vmem:[#allocation5 + $0x28] sm:$0xff] %v2153
    %2170 = vst [vmem:[#allocation5 + $0x30] sm:$0xff] %v2154
    %2171 = vst [vmem:[#allocation5 + $0x38] sm:$0xff] %v2155
    %2172 = vst [vmem:[#allocation5 + $0x40] sm:$0xff] %v2156
    %2173 = vst [vmem:[#allocation5 + $0x48] sm:$0xff] %v2157
    %2174 = vst [vmem:[#allocation5 + $0x50] sm:$0xff] %v2158
    %2175 = vst [vmem:[#allocation5 + $0x58] sm:$0xff] %v2159
    %2176 = vst [vmem:[#allocation5 + $0x60] sm:$0xff] %v2160
    %2177 = vst [vmem:[#allocation5 + $0x68] sm:$0xff] %v2161
    %2178 = vst [vmem:[#allocation5 + $0x70] sm:$0xff] %v2162
    %2179 = vst [vmem:[#allocation5 + $0x78] sm:$0xff] %v2163
    // Predicated region
    $region18: #{tpu_custom_call.1} parent=1 // pred_check
      _
    $region19: #{tpu_custom_call.1} parent=1 // pred_check_branch
      %2181 = sbr.rel (0) target = $region21
    $region20: #{tpu_custom_call.1} parent=1 // pred_region
      %s2183 = ssub.s32 2048, 2048
      %2184 = vsyncadd [#allocation4], %s2183
      %s2185 = sshll.u32 [#allocation5], 4
      %s2186 = int_to_ptr.vmem [resolvable:$true] %s2185
      %2191 = dma.vmem_to_hbm [thread:$0]  %s2186, 2048, %s3, [#allocation4], 128, 128, 8
    $region21: #{tpu_custom_call.1} parent=1 // pred_fallthru
      _
    // Predicated region
    $region22: #{tpu_custom_call.1} parent=1 // pred_check
      _
    $region23: #{tpu_custom_call.1} parent=1 // pred_check_branch
      %2193 = sbr.rel (0) target = $region25
    $region24: #{tpu_custom_call.1} parent=1 // pred_region
      %2194 = dma.done [#allocation4], 2048
    $region25: #{tpu_custom_call.1} parent=1 // pred_fallthru
      _
    %2195 = vsyncpa [#allocation3], 1
    %2196 = vsyncpa [#allocation4], 1

</llo_original>
